<compile_context>
chip_gen: v5e
topology: v5e:2x2
jax: 0.10.0
libtpu: 0.0.40
codegen_flags: <defaults>
</compile_context>

<pallas_src>
import functools

import jax
import jax.numpy as jnp
from jax import lax
from jax.experimental import pallas as pl
from jax.experimental.pallas import tpu as pltpu
import numpy as np


def _round_up(x, m):
    return ((x + m - 1) // m) * m


def _sigmoid_t(x):
    # sigmoid(x) = 0.5*(tanh(x/2)+1): a single EUP op per gate instead of exp + rcp.
    return 0.5 * (jnp.tanh(0.5 * x) + 1.0)


# ------------------------------------------------------------------
# Pallas kernel: masked bidirectional single-layer LSTM + mean over directions
# ------------------------------------------------------------------
def _bilstm_mean_kernel(x_ref, len_ref, wihf_ref, wihb_ref, bf_ref, bb_ref,
                        whhf_ref, whhb_ref, out_ref, gxf_scr, gxb_scr,
                        *, T, BT, EP, GS, packed):
    """
    x_ref:     (T, BT, EP)   time-major embeddings for this batch tile (matmul dtype).
    len_ref:   (BT, 1)       int32 description lengths (0 for padded batch rows).
    wih*_ref:  (EP, 4*GS)    input weights per direction, gate-packed (matmul dtype).
    b*_ref:    (1, 4*GS)     b_ih + b_hh per direction, gate-packed, f32.
    whh*_ref:  (EP, 4*GS)    recurrent weights per direction, gate-packed (matmul dtype).
    out_ref:   (BT, EP)      0.5 * (h_fwd_final + h_bwd_final), f32.
    gx*_scr:   (T*BT, 4*GS)  VMEM scratch holding the hoisted input projections.

    Gate packing: gate k (i,f,g,o) occupies lanes [k*GS, k*GS + E) (zero padded).
    packed=True  -> GS=32, all 4 gates in one 128-lane group (requires 4*E <= 128).
    packed=False -> GS=EP, each gate block starts on a 128-lane boundary.
    """
    GW = 4 * GS

    # ---- pre-pass: hoist x @ W_ih (+ bias) for BOTH directions out of the recurrence
    # as throughput-shaped MXU matmuls written straight into VMEM scratch.
    x2 = x_ref[...].reshape(T * BT, EP)        # layout-trivial: BT is a sublane-tile multiple
    gxf_scr[...] = (jnp.dot(x2, wihf_ref[...], preferred_element_type=jnp.float32)
                    + bf_ref[...]).astype(gxf_scr.dtype)
    gxb_scr[...] = (jnp.dot(x2, wihb_ref[...], preferred_element_type=jnp.float32)
                    + bb_ref[...]).astype(gxb_scr.dtype)

    # ---- loop invariants hoisted once (JAX does not CSE broadcast_in_dim).
    len_b = jnp.broadcast_to(len_ref[...], (BT, EP))            # (BT, EP) int32
    if packed:
        lane = lax.broadcasted_iota(jnp.int32, (BT, GW), 1)
        g_mask = (lane >= 2 * GS) & (lane < 3 * GS)             # cell-gate (tanh) lanes

    def cell(gates, h, c):
        if packed:
            # [i|f|g|o] live in one 128-lane vreg: 2 EUP passes + 3 XLU rolls/direction.
            sg = _sigmoid_t(gates)
            th = jnp.tanh(gates)
            act = jnp.where(g_mask, th, sg)
            i_g = act                                           # gate i already at lane 0
            f_g = pltpu.roll(act, GW - 1 * GS, axis=1)          # lanes [GS..)   -> lane 0
            g_g = pltpu.roll(act, GW - 2 * GS, axis=1)          # lanes [2*GS..) -> lane 0
            o_g = pltpu.roll(act, GW - 3 * GS, axis=1)          # lanes [3*GS..) -> lane 0
        else:
            # gate blocks are 128-lane aligned -> pure full-vreg slices.
            i_g = _sigmoid_t(gates[:, 0 * GS:1 * GS])
            f_g = _sigmoid_t(gates[:, 1 * GS:2 * GS])
            g_g = jnp.tanh(gates[:, 2 * GS:3 * GS])
            o_g = _sigmoid_t(gates[:, 3 * GS:4 * GS])
        c_new = f_g * c + i_g * g_g
        h_new = o_g * jnp.tanh(c_new)
        return h_new, c_new

    def step(i, carry):
        h_f, c_f, h_b, c_b = carry
        t_f, t_b = i, T - 1 - i
        # Two independent dependency chains per iteration (fwd @ t_f, bwd @ t_b).
        # TODO(synk): if bundle dumps show the per-step whh weight push dominating,
        # keep whh resident with pltpu.matmul_push_rhs / matmul_acc_lhs / matmul_pop.
        gates_f = (gxf_scr[t_f * BT:(t_f + 1) * BT, :].astype(jnp.float32)
                   + jnp.dot(h_f.astype(whhf_ref.dtype), whhf_ref[...],
                             preferred_element_type=jnp.float32))
        gates_b = (gxb_scr[t_b * BT:(t_b + 1) * BT, :].astype(jnp.float32)
                   + jnp.dot(h_b.astype(whhb_ref.dtype), whhb_ref[...],
                             preferred_element_type=jnp.float32))
        hf_new, cf_new = cell(gates_f, h_f, c_f)
        hb_new, cb_new = cell(gates_b, h_b, c_b)
        v_f = t_f < len_b                                       # full-vreg compares
        v_b = t_b < len_b
        return (jnp.where(v_f, hf_new, h_f), jnp.where(v_f, cf_new, c_f),
                jnp.where(v_b, hb_new, h_b), jnp.where(v_b, cb_new, c_b))

    z = jnp.zeros((BT, EP), jnp.float32)
    carry = (z, z, z, z)
    # T is small & static here -> fully unroll so the two direction chains interleave
    # and all slice offsets are static.
    # TODO(synk): for T beyond ~32 switch to lax.fori_loop(..., unroll=2..4).
    for i in range(T):
        carry = step(i, carry)
    h_f, _, h_b, _ = carry

    # torch.mean(h, dim=0) over d = 2 directions; lane-dense unmasked store.
    out_ref[...] = 0.5 * (h_f + h_b)


# ------------------------------------------------------------------
# Weight repacking: gate k's columns land at [k*GS, k*GS + E); zero padding keeps the
# padded lanes of h/c exactly zero in the aligned layout and harmless in the packed one.
# ------------------------------------------------------------------
def _pack_gate_weight(w, E, EP, GS, dtype):
    out = jnp.zeros((EP, 4 * GS), jnp.float32)
    for k in range(4):
        out = out.at[:E, k * GS:k * GS + E].set(w[:, k * E:(k + 1) * E])
    return out.astype(dtype)


def _pack_gate_bias(b, E, GS):
    out = jnp.zeros((1, 4 * GS), jnp.float32)
    for k in range(4):
        out = out.at[:, k * GS:k * GS + E].set(b[:, k * E:(k + 1) * E])
    return out                                   # bias stays f32 (added post-matmul)


# ------------------------------------------------------------------
# Wrapper
# ------------------------------------------------------------------
def bilstm_mean(x_tbe, lengths, params, *, matmul_dtype=jnp.bfloat16, batch_tile=None):
    """x_tbe: (T, B, E) f32 time-major embeddings, lengths: (B,) int32.
    Returns (B, E) f32 description encodings."""
    T, B, E = x_tbe.shape
    mdt = jnp.dtype(matmul_dtype)
    SM = 16 if mdt.itemsize == 2 else 8          # native sublane tile for the matmul dtype
    EP = _round_up(max(E, 1), 128)               # hidden padded to full 128-lane groups
    packed = (4 * E <= 128)                      # all 4 gates fit one 128-lane group
    GS = 32 if packed else EP                    # lane slot per gate
    GW = 4 * GS

    # Batch tile: a sublane-tile multiple, capped at 256 rows (fills v6e/v7x MXU at scale).
    if batch_tile is None:
        BT = min(_round_up(B, SM), 256)
    else:
        BT = _round_up(batch_tile, SM)
    BP = _round_up(B, BT)
    n_tiles = BP // BT

    # Pad once in the wrapper; padded batch rows have length 0 so their state stays 0.
    x_pad = jnp.zeros((T, BP, EP), mdt).at[:, :B, :E].set(x_tbe.astype(mdt))
    len_pad = jnp.zeros((BP, 1), jnp.int32).at[:B, 0].set(lengths.astype(jnp.int32))

    wih_f = _pack_gate_weight(params["wih_f"], E, EP, GS, mdt)
    wih_b = _pack_gate_weight(params["wih_b"], E, EP, GS, mdt)
    whh_f = _pack_gate_weight(params["whh_f"], E, EP, GS, mdt)
    whh_b = _pack_gate_weight(params["whh_b"], E, EP, GS, mdt)
    b_f = _pack_gate_bias(params["b_f"], E, GS)
    b_b = _pack_gate_bias(params["b_b"], E, GS)

    # VMEM budget from the actual per-tile formula (double-buffered inputs + resident
    # scratch), clamped to the smallest physical VMEM across generations (v7x: 64 MiB).
    in_bytes = (T * BT * EP * mdt.itemsize            # x tile
                + BT * 4                              # lengths
                + 4 * EP * GW * mdt.itemsize          # wih_f/b, whh_f/b
                + 2 * GW * 4                          # biases
                + BT * EP * 4)                        # output tile
    scr_bytes = 2 * T * BT * GW * mdt.itemsize
    vmem_limit = int(min(64 * 2 ** 20, max(8 * 2 ** 20, 2 * (2 * in_bytes + scr_bytes))))

    kernel = functools.partial(_bilstm_mean_kernel,
                               T=T, BT=BT, EP=EP, GS=GS, packed=packed)
    # TODO(synk): overlap the whh_f/whh_b HBM fetch with the pre-pass matmul via
    # memory_space=pl.ANY + pltpu.make_async_copy if DMA latency shows in profiles.
    out = pl.pallas_call(
        kernel,
        out_shape=jax.ShapeDtypeStruct((BP, EP), jnp.float32),
        grid=(n_tiles,),
        in_specs=[
            pl.BlockSpec((T, BT, EP), lambda b: (0, b, 0)),   # x (batch-tiled)
            pl.BlockSpec((BT, 1), lambda b: (b, 0)),          # lengths
            pl.BlockSpec((EP, GW), lambda b: (0, 0)),         # wih_f
            pl.BlockSpec((EP, GW), lambda b: (0, 0)),         # wih_b
            pl.BlockSpec((1, GW), lambda b: (0, 0)),          # b_f
            pl.BlockSpec((1, GW), lambda b: (0, 0)),          # b_b
            pl.BlockSpec((EP, GW), lambda b: (0, 0)),         # whh_f
            pl.BlockSpec((EP, GW), lambda b: (0, 0)),         # whh_b
        ],
        out_specs=pl.BlockSpec((BT, EP), lambda b: (b, 0)),
        scratch_shapes=[pltpu.VMEM((T * BT, GW), mdt),
                        pltpu.VMEM((T * BT, GW), mdt)],
        compiler_params=pltpu.CompilerParams(
            dimension_semantics=("parallel",),   # batch tiles shard across TCs (v7x: 2)
            vmem_limit_bytes=vmem_limit),
    )(x_pad, len_pad, wih_f, wih_b, b_f, b_b, whh_f, whh_b)
    return out[:B, :E]


# ------------------------------------------------------------------
# Pure-JAX reference (for correctness checks, unpadded)
# ------------------------------------------------------------------
def bilstm_mean_ref(x_tbe, lengths, params):
    T, B, E = x_tbe.shape

    def direction(wih, whh, b, reverse):
        h = jnp.zeros((B, E), jnp.float32)
        c = jnp.zeros((B, E), jnp.float32)
        ts = range(T - 1, -1, -1) if reverse else range(T)
        for t in ts:
            gates = x_tbe[t] @ wih + h @ whh + b
            i_g = jax.nn.sigmoid(gates[:, 0 * E:1 * E])
            f_g = jax.nn.sigmoid(gates[:, 1 * E:2 * E])
            g_g = jnp.tanh(gates[:, 2 * E:3 * E])
            o_g = jax.nn.sigmoid(gates[:, 3 * E:4 * E])
            c_new = f_g * c + i_g * g_g
            h_new = o_g * jnp.tanh(c_new)
            mask = (t < lengths)[:, None]
            h = jnp.where(mask, h_new, h)
            c = jnp.where(mask, c_new, c)
        return h

    h_f = direction(params["wih_f"], params["whh_f"], params["b_f"], False)
    h_b = direction(params["wih_b"], params["whh_b"], params["b_b"], True)
    return 0.5 * (h_f + h_b)


# ------------------------------------------------------------------
# Glue: tokenization (string -> padded indices), embedding lookup, params
# ------------------------------------------------------------------
def tokenize(descriptions, known_words_map):
    word_indices = [[known_words_map.get(w, 0)
                     for w in d.replace(".", "").replace(",", "").lower().split()]
                    for d in descriptions]
    lengths = [len(w) for w in word_indices]
    B, T = len(word_indices), max(lengths)
    padded = np.zeros((B, T), np.int32)
    for i, L in enumerate(lengths):
        padded[i, :L] = word_indices[i]
    return jnp.asarray(padded), jnp.asarray(lengths, jnp.int32)


def init_params(key, vocab_size, E):
    ks = jax.random.split(key, 9)
    scale = 1.0 / np.sqrt(E)
    emb = jax.random.normal(ks[0], (vocab_size, E), jnp.float32) * 0.1
    emb = emb.at[0].set(0.0)  # padding_idx=0
    u = lambda k, shape: jax.random.uniform(k, shape, jnp.float32, -scale, scale)
    # PyTorch stores W_ih as (4E, E); we keep the transposed (E, 4E) layout,
    # gate order: input, forget, cell, output.
    return {
        "emb": emb,
        "wih_f": u(ks[1], (E, 4 * E)),
        "whh_f": u(ks[2], (E, 4 * E)),
        "b_f": (u(ks[3], (1, 4 * E)) + u(ks[4], (1, 4 * E))),  # b_ih + b_hh
        "wih_b": u(ks[5], (E, 4 * E)),
        "whh_b": u(ks[6], (E, 4 * E)),
        "b_b": (u(ks[7], (1, 4 * E)) + u(ks[8], (1, 4 * E))),
    }


def language_encoder_forward(descriptions, known_words_map, params, **kw):
    padded_idx, lengths = tokenize(descriptions, known_words_map)   # (B, T), (B,)
    embedded = params["emb"][padded_idx]                            # (B, T, E) gather (glue)
    x_tbe = jnp.transpose(embedded, (1, 0, 2)).astype(jnp.float32)  # (T, B, E) time-major
    return bilstm_mean(x_tbe, lengths, params, **kw), (x_tbe, lengths)


if __name__ == "__main__":
    known_words = ["the", "cat", "sat", "on", "mat", "a", "dog", "ran", "fast"]
    known_words_map = {c: i + 1 for i, c in enumerate(known_words)}
    known_words_map["<unk>"] = 0
    vocab_size = len(known_words_map)

    # ---- config 1: embedding_dim=32 -> packed-gate layout (4E <= 128) -------------
    embedding_dim = 32
    params = init_params(jax.random.PRNGKey(0), vocab_size, embedding_dim)
    descriptions = [
        "The cat sat on the mat.",
        "A dog ran fast, very fast",
        "the unknown creature sat",
    ]

    # bf16 MXU operands (default)
    out_bf, (x_tbe, lengths) = language_encoder_forward(
        descriptions, known_words_map, params, matmul_dtype=jnp.bfloat16)
    out_bf = jax.block_until_ready(out_bf)
    ref = bilstm_mean_ref(x_tbe, lengths, params)
    assert out_bf.shape == (len(descriptions), embedding_dim)
    assert jnp.allclose(out_bf, ref, atol=3e-2, rtol=3e-2), \
        "packed-gate bf16 path mismatch vs reference"

    # f32 MXU operands (tight-tolerance check of packing / roll / masking math)
    out_f32, _ = language_encoder_forward(
        descriptions, known_words_map, params, matmul_dtype=jnp.float32)
    out_f32 = jax.block_until_ready(out_f32)
    assert jnp.allclose(out_f32, ref, atol=1e-3, rtol=1e-3), \
        "packed-gate f32 path mismatch vs reference"

    # ---- config 2: embedding_dim=48 -> aligned-gate layout (4E > 128), 2 batch tiles
    embedding_dim2 = 48
    params2 = init_params(jax.random.PRNGKey(1), vocab_size, embedding_dim2)
    descriptions2 = [
        "the cat sat on the mat",
        "a dog ran fast",
        "the unknown creature sat on a mat",
        "cat",
        "a cat and a dog",
        "the mat",
        "dog ran",
        "the dog sat on the cat",
        "fast fast fast",
    ]
    out2, (x2, len2) = language_encoder_forward(
        descriptions2, known_words_map, params2,
        matmul_dtype=jnp.float32, batch_tile=8)     # BP=16, BT=8 -> grid of 2 tiles
    out2 = jax.block_until_ready(out2)
    ref2 = bilstm_mean_ref(x2, len2, params2)
    assert out2.shape == (len(descriptions2), embedding_dim2)
    assert jnp.allclose(out2, ref2, atol=1e-3, rtol=1e-3), \
        "aligned-gate multi-tile path mismatch vs reference"

    print("KERNEL_OK")
</pallas_src>

<mosaic_0001>
module attributes {stable_mosaic.version = 11 : i64} {
  func.func @_bilstm_mean_kernel(%arg0: i32, %arg1: memref<6x16x128xbf16, #tpu.memory_space<vmem>>, %arg2: memref<16x1xi32, #tpu.memory_space<vmem>>, %arg3: memref<128x128xbf16, #tpu.memory_space<vmem>>, %arg4: memref<128x128xbf16, #tpu.memory_space<vmem>>, %arg5: memref<1x128xf32, #tpu.memory_space<vmem>>, %arg6: memref<1x128xf32, #tpu.memory_space<vmem>>, %arg7: memref<128x128xbf16, #tpu.memory_space<vmem>>, %arg8: memref<128x128xbf16, #tpu.memory_space<vmem>>, %arg9: memref<16x128xf32, #tpu.memory_space<vmem>>, %arg10: memref<96x128xbf16, #tpu.memory_space<vmem>>, %arg11: memref<96x128xbf16, #tpu.memory_space<vmem>>) attributes {dimension_semantics = [#tpu.dimension_semantics<parallel>], iteration_bounds = array<i64: 1>, scalar_prefetch = 0 : i64, scratch_operands = 2 : i64, tpu.core_type = #tpu.core_type<tc>, window_params = [{transform_indices = @transform_0, window_bounds = array<i64: 6, 16, 128>}, {transform_indices = @transform_1, window_bounds = array<i64: 16, 1>}, {pipeline_mode = #tpu.pipeline_mode<synchronous>, transform_indices = @transform_2, window_bounds = array<i64: 128, 128>}, {pipeline_mode = #tpu.pipeline_mode<synchronous>, transform_indices = @transform_3, window_bounds = array<i64: 128, 128>}, {pipeline_mode = #tpu.pipeline_mode<synchronous>, transform_indices = @transform_4, window_bounds = array<i64: 1, 128>}, {pipeline_mode = #tpu.pipeline_mode<synchronous>, transform_indices = @transform_5, window_bounds = array<i64: 1, 128>}, {pipeline_mode = #tpu.pipeline_mode<synchronous>, transform_indices = @transform_6, window_bounds = array<i64: 128, 128>}, {pipeline_mode = #tpu.pipeline_mode<synchronous>, transform_indices = @transform_7, window_bounds = array<i64: 128, 128>}, {transform_indices = @transform_8, window_bounds = array<i64: 16, 128>}]} {
    %c0 = arith.constant 0 : index
    %c0_0 = arith.constant 0 : index
    %c0_1 = arith.constant 0 : index
    %0 = vector.load %arg1[%c0, %c0_0, %c0_1] : memref<6x16x128xbf16, #tpu.memory_space<vmem>>, vector<6x16x128xbf16>
    %1 = vector.shape_cast %0 : vector<6x16x128xbf16> to vector<96x128xbf16>
    %c0_2 = arith.constant 0 : index
    %c0_3 = arith.constant 0 : index
    %2 = vector.load %arg3[%c0_2, %c0_3] : memref<128x128xbf16, #tpu.memory_space<vmem>>, vector<128x128xbf16>
    %cst = arith.constant dense<0.000000e+00> : vector<96x128xf32>
    %3 = tpu.matmul %1, %2, %cst {dimension_numbers = #tpu.dot_dimension_numbers<[1], [0], [0], [1], [0, 0, 1, 1], [], []>} : vector<96x128xbf16>, vector<128x128xbf16>, vector<96x128xf32> -> vector<96x128xf32>
    %c0_4 = arith.constant 0 : index
    %c0_5 = arith.constant 0 : index
    %4 = vector.load %arg5[%c0_4, %c0_5] : memref<1x128xf32, #tpu.memory_space<vmem>>, vector<1x128xf32>
    %5 = vector.broadcast %4 : vector<1x128xf32> to vector<96x128xf32>
    %6 = arith.addf %3, %5 : vector<96x128xf32>
    %7 = arith.truncf %6 : vector<96x128xf32> to vector<96x128xbf16>
    %c0_6 = arith.constant 0 : index
    %c0_7 = arith.constant 0 : index
    %8 = vector.load %arg10[%c0_6, %c0_7] : memref<96x128xbf16, #tpu.memory_space<vmem>>, vector<96x128xbf16>
    tpu.vector_store %arg10[%c0_6, %c0_7], %7 {strides = array<i32>} : memref<96x128xbf16, #tpu.memory_space<vmem>>, vector<96x128xbf16>,
    %c0_8 = arith.constant 0 : index
    %c0_9 = arith.constant 0 : index
    %9 = vector.load %arg4[%c0_8, %c0_9] : memref<128x128xbf16, #tpu.memory_space<vmem>>, vector<128x128xbf16>
    %cst_10 = arith.constant dense<0.000000e+00> : vector<96x128xf32>
    %10 = tpu.matmul %1, %9, %cst_10 {dimension_numbers = #tpu.dot_dimension_numbers<[1], [0], [0], [1], [0, 0, 1, 1], [], []>} : vector<96x128xbf16>, vector<128x128xbf16>, vector<96x128xf32> -> vector<96x128xf32>
    %c0_11 = arith.constant 0 : index
    %c0_12 = arith.constant 0 : index
    %11 = vector.load %arg6[%c0_11, %c0_12] : memref<1x128xf32, #tpu.memory_space<vmem>>, vector<1x128xf32>
    %12 = vector.broadcast %11 : vector<1x128xf32> to vector<96x128xf32>
    %13 = arith.addf %10, %12 : vector<96x128xf32>
    %14 = arith.truncf %13 : vector<96x128xf32> to vector<96x128xbf16>
    %c0_13 = arith.constant 0 : index
    %c0_14 = arith.constant 0 : index
    %15 = vector.load %arg11[%c0_13, %c0_14] : memref<96x128xbf16, #tpu.memory_space<vmem>>, vector<96x128xbf16>
    tpu.vector_store %arg11[%c0_13, %c0_14], %14 {strides = array<i32>} : memref<96x128xbf16, #tpu.memory_space<vmem>>, vector<96x128xbf16>,
    %c0_15 = arith.constant 0 : index
    %c0_16 = arith.constant 0 : index
    %16 = vector.load %arg2[%c0_15, %c0_16] : memref<16x1xi32, #tpu.memory_space<vmem>>, vector<16x1xi32>
    %17 = vector.shape_cast %16 : vector<16x1xi32> to vector<16x1xi32>
    %18 = vector.broadcast %17 : vector<16x1xi32> to vector<16x128xi32>
    %19 = tpu.iota {dimensions = array<i32: 1>} : vector<16x128xi32>
    %c64_i32 = arith.constant 64 : i32
    %20 = vector.broadcast %c64_i32 : i32 to vector<16x128xi32>
    %21 = arith.cmpi sge, %19, %20 : vector<16x128xi32>
    %c96_i32 = arith.constant 96 : i32
    %22 = vector.broadcast %c96_i32 : i32 to vector<16x128xi32>
    %23 = arith.cmpi slt, %19, %22 : vector<16x128xi32>
    %24 = arith.andi %21, %23 : vector<16x128xi1>
    %cst_17 = arith.constant 0.000000e+00 : f32
    %25 = vector.broadcast %cst_17 : f32 to vector<16x128xf32>
    %c0_18 = arith.constant 0 : index
    %c0_19 = arith.constant 0 : index
    %26 = vector.load %arg10[%c0_18, %c0_19] : memref<96x128xbf16, #tpu.memory_space<vmem>>, vector<16x128xbf16>
    %27 = arith.extf %26 : vector<16x128xbf16> to vector<16x128xf32>
    %28 = arith.truncf %25 : vector<16x128xf32> to vector<16x128xbf16>
    %c0_20 = arith.constant 0 : index
    %c0_21 = arith.constant 0 : index
    %29 = vector.load %arg7[%c0_20, %c0_21] : memref<128x128xbf16, #tpu.memory_space<vmem>>, vector<128x128xbf16>
    %cst_22 = arith.constant dense<0.000000e+00> : vector<16x128xf32>
    %30 = tpu.matmul %28, %29, %cst_22 {dimension_numbers = #tpu.dot_dimension_numbers<[1], [0], [0], [1], [0, 0, 1, 1], [], []>} : vector<16x128xbf16>, vector<128x128xbf16>, vector<16x128xf32> -> vector<16x128xf32>
    %31 = arith.addf %27, %30 : vector<16x128xf32>
    %c80 = arith.constant 80 : index
    %c0_23 = arith.constant 0 : index
    %32 = vector.load %arg11[%c80, %c0_23] : memref<96x128xbf16, #tpu.memory_space<vmem>>, vector<16x128xbf16>
    %33 = arith.extf %32 : vector<16x128xbf16> to vector<16x128xf32>
    %34 = arith.truncf %25 : vector<16x128xf32> to vector<16x128xbf16>
    %c0_24 = arith.constant 0 : index
    %c0_25 = arith.constant 0 : index
    %35 = vector.load %arg8[%c0_24, %c0_25] : memref<128x128xbf16, #tpu.memory_space<vmem>>, vector<128x128xbf16>
    %cst_26 = arith.constant dense<0.000000e+00> : vector<16x128xf32>
    %36 = tpu.matmul %34, %35, %cst_26 {dimension_numbers = #tpu.dot_dimension_numbers<[1], [0], [0], [1], [0, 0, 1, 1], [], []>} : vector<16x128xbf16>, vector<128x128xbf16>, vector<16x128xf32> -> vector<16x128xf32>
    %37 = arith.addf %33, %36 : vector<16x128xf32>
    %cst_27 = arith.constant 5.000000e-01 : f32
    %38 = vector.broadcast %cst_27 : f32 to vector<16x128xf32>
    %39 = arith.mulf %38, %31 : vector<16x128xf32>
    %40 = math.tanh %39 : vector<16x128xf32>
    %cst_28 = arith.constant 1.000000e+00 : f32
    %41 = vector.broadcast %cst_28 : f32 to vector<16x128xf32>
    %42 = arith.addf %40, %41 : vector<16x128xf32>
    %cst_29 = arith.constant 5.000000e-01 : f32
    %43 = vector.broadcast %cst_29 : f32 to vector<16x128xf32>
    %44 = arith.mulf %43, %42 : vector<16x128xf32>
    %45 = math.tanh %31 : vector<16x128xf32>
    %46 = arith.select %24, %45, %44 : vector<16x128xi1>, vector<16x128xf32>
    %c96_i32_30 = arith.constant 96 : i32
    %47 = tpu.dynamic_rotate %46 by %c96_i32_30 dim 1 : vector<16x128xf32>, i32 -> vector<16x128xf32>
    %c64_i32_31 = arith.constant 64 : i32
    %48 = tpu.dynamic_rotate %46 by %c64_i32_31 dim 1 : vector<16x128xf32>, i32 -> vector<16x128xf32>
    %c32_i32 = arith.constant 32 : i32
    %49 = tpu.dynamic_rotate %46 by %c32_i32 dim 1 : vector<16x128xf32>, i32 -> vector<16x128xf32>
    %50 = arith.mulf %47, %25 : vector<16x128xf32>
    %51 = arith.mulf %46, %48 : vector<16x128xf32>
    %52 = arith.addf %50, %51 : vector<16x128xf32>
    %53 = math.tanh %52 : vector<16x128xf32>
    %54 = arith.mulf %49, %53 : vector<16x128xf32>
    %cst_32 = arith.constant 5.000000e-01 : f32
    %55 = vector.broadcast %cst_32 : f32 to vector<16x128xf32>
    %56 = arith.mulf %55, %37 : vector<16x128xf32>
    %57 = math.tanh %56 : vector<16x128xf32>
    %cst_33 = arith.constant 1.000000e+00 : f32
    %58 = vector.broadcast %cst_33 : f32 to vector<16x128xf32>
    %59 = arith.addf %57, %58 : vector<16x128xf32>
    %cst_34 = arith.constant 5.000000e-01 : f32
    %60 = vector.broadcast %cst_34 : f32 to vector<16x128xf32>
    %61 = arith.mulf %60, %59 : vector<16x128xf32>
    %62 = math.tanh %37 : vector<16x128xf32>
    %63 = arith.select %24, %62, %61 : vector<16x128xi1>, vector<16x128xf32>
    %c96_i32_35 = arith.constant 96 : i32
    %64 = tpu.dynamic_rotate %63 by %c96_i32_35 dim 1 : vector<16x128xf32>, i32 -> vector<16x128xf32>
    %c64_i32_36 = arith.constant 64 : i32
    %65 = tpu.dynamic_rotate %63 by %c64_i32_36 dim 1 : vector<16x128xf32>, i32 -> vector<16x128xf32>
    %c32_i32_37 = arith.constant 32 : i32
    %66 = tpu.dynamic_rotate %63 by %c32_i32_37 dim 1 : vector<16x128xf32>, i32 -> vector<16x128xf32>
    %67 = arith.mulf %64, %25 : vector<16x128xf32>
    %68 = arith.mulf %63, %65 : vector<16x128xf32>
    %69 = arith.addf %67, %68 : vector<16x128xf32>
    %70 = math.tanh %69 : vector<16x128xf32>
    %71 = arith.mulf %66, %70 : vector<16x128xf32>
    %c0_i32 = arith.constant 0 : i32
    %72 = vector.broadcast %c0_i32 : i32 to vector<16x128xi32>
    %73 = arith.cmpi sgt, %18, %72 : vector<16x128xi32>
    %c5_i32 = arith.constant 5 : i32
    %74 = vector.broadcast %c5_i32 : i32 to vector<16x128xi32>
    %75 = arith.cmpi sgt, %18, %74 : vector<16x128xi32>
    %76 = arith.select %73, %54, %25 : vector<16x128xi1>, vector<16x128xf32>
    %77 = arith.select %73, %52, %25 : vector<16x128xi1>, vector<16x128xf32>
    %78 = arith.select %75, %71, %25 : vector<16x128xi1>, vector<16x128xf32>
    %79 = arith.select %75, %69, %25 : vector<16x128xi1>, vector<16x128xf32>
    %c16 = arith.constant 16 : index
    %c0_38 = arith.constant 0 : index
    %80 = vector.load %arg10[%c16, %c0_38] : memref<96x128xbf16, #tpu.memory_space<vmem>>, vector<16x128xbf16>
    %81 = arith.extf %80 : vector<16x128xbf16> to vector<16x128xf32>
    %82 = arith.truncf %76 : vector<16x128xf32> to vector<16x128xbf16>
    %c0_39 = arith.constant 0 : index
    %c0_40 = arith.constant 0 : index
    %83 = vector.load %arg7[%c0_39, %c0_40] : memref<128x128xbf16, #tpu.memory_space<vmem>>, vector<128x128xbf16>
    %cst_41 = arith.constant dense<0.000000e+00> : vector<16x128xf32>
    %84 = tpu.matmul %82, %83, %cst_41 {dimension_numbers = #tpu.dot_dimension_numbers<[1], [0], [0], [1], [0, 0, 1, 1], [], []>} : vector<16x128xbf16>, vector<128x128xbf16>, vector<16x128xf32> -> vector<16x128xf32>
    %85 = arith.addf %81, %84 : vector<16x128xf32>
    %c64 = arith.constant 64 : index
    %c0_42 = arith.constant 0 : index
    %86 = vector.load %arg11[%c64, %c0_42] : memref<96x128xbf16, #tpu.memory_space<vmem>>, vector<16x128xbf16>
    %87 = arith.extf %86 : vector<16x128xbf16> to vector<16x128xf32>
    %88 = arith.truncf %78 : vector<16x128xf32> to vector<16x128xbf16>
    %c0_43 = arith.constant 0 : index
    %c0_44 = arith.constant 0 : index
    %89 = vector.load %arg8[%c0_43, %c0_44] : memref<128x128xbf16, #tpu.memory_space<vmem>>, vector<128x128xbf16>
    %cst_45 = arith.constant dense<0.000000e+00> : vector<16x128xf32>
    %90 = tpu.matmul %88, %89, %cst_45 {dimension_numbers = #tpu.dot_dimension_numbers<[1], [0], [0], [1], [0, 0, 1, 1], [], []>} : vector<16x128xbf16>, vector<128x128xbf16>, vector<16x128xf32> -> vector<16x128xf32>
    %91 = arith.addf %87, %90 : vector<16x128xf32>
    %cst_46 = arith.constant 5.000000e-01 : f32
    %92 = vector.broadcast %cst_46 : f32 to vector<16x128xf32>
    %93 = arith.mulf %92, %85 : vector<16x128xf32>
    %94 = math.tanh %93 : vector<16x128xf32>
    %cst_47 = arith.constant 1.000000e+00 : f32
    %95 = vector.broadcast %cst_47 : f32 to vector<16x128xf32>
    %96 = arith.addf %94, %95 : vector<16x128xf32>
    %cst_48 = arith.constant 5.000000e-01 : f32
    %97 = vector.broadcast %cst_48 : f32 to vector<16x128xf32>
    %98 = arith.mulf %97, %96 : vector<16x128xf32>
    %99 = math.tanh %85 : vector<16x128xf32>
    %100 = arith.select %24, %99, %98 : vector<16x128xi1>, vector<16x128xf32>
    %c96_i32_49 = arith.constant 96 : i32
    %101 = tpu.dynamic_rotate %100 by %c96_i32_49 dim 1 : vector<16x128xf32>, i32 -> vector<16x128xf32>
    %c64_i32_50 = arith.constant 64 : i32
    %102 = tpu.dynamic_rotate %100 by %c64_i32_50 dim 1 : vector<16x128xf32>, i32 -> vector<16x128xf32>
    %c32_i32_51 = arith.constant 32 : i32
    %103 = tpu.dynamic_rotate %100 by %c32_i32_51 dim 1 : vector<16x128xf32>, i32 -> vector<16x128xf32>
    %104 = arith.mulf %101, %77 : vector<16x128xf32>
    %105 = arith.mulf %100, %102 : vector<16x128xf32>
    %106 = arith.addf %104, %105 : vector<16x128xf32>
    %107 = math.tanh %106 : vector<16x128xf32>
    %108 = arith.mulf %103, %107 : vector<16x128xf32>
    %cst_52 = arith.constant 5.000000e-01 : f32
    %109 = vector.broadcast %cst_52 : f32 to vector<16x128xf32>
    %110 = arith.mulf %109, %91 : vector<16x128xf32>
    %111 = math.tanh %110 : vector<16x128xf32>
    %cst_53 = arith.constant 1.000000e+00 : f32
    %112 = vector.broadcast %cst_53 : f32 to vector<16x128xf32>
    %113 = arith.addf %111, %112 : vector<16x128xf32>
    %cst_54 = arith.constant 5.000000e-01 : f32
    %114 = vector.broadcast %cst_54 : f32 to vector<16x128xf32>
    %115 = arith.mulf %114, %113 : vector<16x128xf32>
    %116 = math.tanh %91 : vector<16x128xf32>
    %117 = arith.select %24, %116, %115 : vector<16x128xi1>, vector<16x128xf32>
    %c96_i32_55 = arith.constant 96 : i32
    %118 = tpu.dynamic_rotate %117 by %c96_i32_55 dim 1 : vector<16x128xf32>, i32 -> vector<16x128xf32>
    %c64_i32_56 = arith.constant 64 : i32
    %119 = tpu.dynamic_rotate %117 by %c64_i32_56 dim 1 : vector<16x128xf32>, i32 -> vector<16x128xf32>
    %c32_i32_57 = arith.constant 32 : i32
    %120 = tpu.dynamic_rotate %117 by %c32_i32_57 dim 1 : vector<16x128xf32>, i32 -> vector<16x128xf32>
    %121 = arith.mulf %118, %79 : vector<16x128xf32>
    %122 = arith.mulf %117, %119 : vector<16x128xf32>
    %123 = arith.addf %121, %122 : vector<16x128xf32>
    %124 = math.tanh %123 : vector<16x128xf32>
    %125 = arith.mulf %120, %124 : vector<16x128xf32>
    %c1_i32 = arith.constant 1 : i32
    %126 = vector.broadcast %c1_i32 : i32 to vector<16x128xi32>
    %127 = arith.cmpi sgt, %18, %126 : vector<16x128xi32>
    %c4_i32 = arith.constant 4 : i32
    %128 = vector.broadcast %c4_i32 : i32 to vector<16x128xi32>
    %129 = arith.cmpi sgt, %18, %128 : vector<16x128xi32>
    %130 = arith.select %127, %108, %76 : vector<16x128xi1>, vector<16x128xf32>
    %131 = arith.select %127, %106, %77 : vector<16x128xi1>, vector<16x128xf32>
    %132 = arith.select %129, %125, %78 : vector<16x128xi1>, vector<16x128xf32>
    %133 = arith.select %129, %123, %79 : vector<16x128xi1>, vector<16x128xf32>
    %c32 = arith.constant 32 : index
    %c0_58 = arith.constant 0 : index
    %134 = vector.load %arg10[%c32, %c0_58] : memref<96x128xbf16, #tpu.memory_space<vmem>>, vector<16x128xbf16>
    %135 = arith.extf %134 : vector<16x128xbf16> to vector<16x128xf32>
    %136 = arith.truncf %130 : vector<16x128xf32> to vector<16x128xbf16>
    %c0_59 = arith.constant 0 : index
    %c0_60 = arith.constant 0 : index
    %137 = vector.load %arg7[%c0_59, %c0_60] : memref<128x128xbf16, #tpu.memory_space<vmem>>, vector<128x128xbf16>
    %cst_61 = arith.constant dense<0.000000e+00> : vector<16x128xf32>
    %138 = tpu.matmul %136, %137, %cst_61 {dimension_numbers = #tpu.dot_dimension_numbers<[1], [0], [0], [1], [0, 0, 1, 1], [], []>} : vector<16x128xbf16>, vector<128x128xbf16>, vector<16x128xf32> -> vector<16x128xf32>
    %139 = arith.addf %135, %138 : vector<16x128xf32>
    %c48 = arith.constant 48 : index
    %c0_62 = arith.constant 0 : index
    %140 = vector.load %arg11[%c48, %c0_62] : memref<96x128xbf16, #tpu.memory_space<vmem>>, vector<16x128xbf16>
    %141 = arith.extf %140 : vector<16x128xbf16> to vector<16x128xf32>
    %142 = arith.truncf %132 : vector<16x128xf32> to vector<16x128xbf16>
    %c0_63 = arith.constant 0 : index
    %c0_64 = arith.constant 0 : index
    %143 = vector.load %arg8[%c0_63, %c0_64] : memref<128x128xbf16, #tpu.memory_space<vmem>>, vector<128x128xbf16>
    %cst_65 = arith.constant dense<0.000000e+00> : vector<16x128xf32>
    %144 = tpu.matmul %142, %143, %cst_65 {dimension_numbers = #tpu.dot_dimension_numbers<[1], [0], [0], [1], [0, 0, 1, 1], [], []>} : vector<16x128xbf16>, vector<128x128xbf16>, vector<16x128xf32> -> vector<16x128xf32>
    %145 = arith.addf %141, %144 : vector<16x128xf32>
    %cst_66 = arith.constant 5.000000e-01 : f32
    %146 = vector.broadcast %cst_66 : f32 to vector<16x128xf32>
    %147 = arith.mulf %146, %139 : vector<16x128xf32>
    %148 = math.tanh %147 : vector<16x128xf32>
    %cst_67 = arith.constant 1.000000e+00 : f32
    %149 = vector.broadcast %cst_67 : f32 to vector<16x128xf32>
    %150 = arith.addf %148, %149 : vector<16x128xf32>
    %cst_68 = arith.constant 5.000000e-01 : f32
    %151 = vector.broadcast %cst_68 : f32 to vector<16x128xf32>
    %152 = arith.mulf %151, %150 : vector<16x128xf32>
    %153 = math.tanh %139 : vector<16x128xf32>
    %154 = arith.select %24, %153, %152 : vector<16x128xi1>, vector<16x128xf32>
    %c96_i32_69 = arith.constant 96 : i32
    %155 = tpu.dynamic_rotate %154 by %c96_i32_69 dim 1 : vector<16x128xf32>, i32 -> vector<16x128xf32>
    %c64_i32_70 = arith.constant 64 : i32
    %156 = tpu.dynamic_rotate %154 by %c64_i32_70 dim 1 : vector<16x128xf32>, i32 -> vector<16x128xf32>
    %c32_i32_71 = arith.constant 32 : i32
    %157 = tpu.dynamic_rotate %154 by %c32_i32_71 dim 1 : vector<16x128xf32>, i32 -> vector<16x128xf32>
    %158 = arith.mulf %155, %131 : vector<16x128xf32>
    %159 = arith.mulf %154, %156 : vector<16x128xf32>
    %160 = arith.addf %158, %159 : vector<16x128xf32>
    %161 = math.tanh %160 : vector<16x128xf32>
    %162 = arith.mulf %157, %161 : vector<16x128xf32>
    %cst_72 = arith.constant 5.000000e-01 : f32
    %163 = vector.broadcast %cst_72 : f32 to vector<16x128xf32>
    %164 = arith.mulf %163, %145 : vector<16x128xf32>
    %165 = math.tanh %164 : vector<16x128xf32>
    %cst_73 = arith.constant 1.000000e+00 : f32
    %166 = vector.broadcast %cst_73 : f32 to vector<16x128xf32>
    %167 = arith.addf %165, %166 : vector<16x128xf32>
    %cst_74 = arith.constant 5.000000e-01 : f32
    %168 = vector.broadcast %cst_74 : f32 to vector<16x128xf32>
    %169 = arith.mulf %168, %167 : vector<16x128xf32>
    %170 = math.tanh %145 : vector<16x128xf32>
    %171 = arith.select %24, %170, %169 : vector<16x128xi1>, vector<16x128xf32>
    %c96_i32_75 = arith.constant 96 : i32
    %172 = tpu.dynamic_rotate %171 by %c96_i32_75 dim 1 : vector<16x128xf32>, i32 -> vector<16x128xf32>
    %c64_i32_76 = arith.constant 64 : i32
    %173 = tpu.dynamic_rotate %171 by %c64_i32_76 dim 1 : vector<16x128xf32>, i32 -> vector<16x128xf32>
    %c32_i32_77 = arith.constant 32 : i32
    %174 = tpu.dynamic_rotate %171 by %c32_i32_77 dim 1 : vector<16x128xf32>, i32 -> vector<16x128xf32>
    %175 = arith.mulf %172, %133 : vector<16x128xf32>
    %176 = arith.mulf %171, %173 : vector<16x128xf32>
    %177 = arith.addf %175, %176 : vector<16x128xf32>
    %178 = math.tanh %177 : vector<16x128xf32>
    %179 = arith.mulf %174, %178 : vector<16x128xf32>
    %c2_i32 = arith.constant 2 : i32
    %180 = vector.broadcast %c2_i32 : i32 to vector<16x128xi32>
    %181 = arith.cmpi sgt, %18, %180 : vector<16x128xi32>
    %c3_i32 = arith.constant 3 : i32
    %182 = vector.broadcast %c3_i32 : i32 to vector<16x128xi32>
    %183 = arith.cmpi sgt, %18, %182 : vector<16x128xi32>
    %184 = arith.select %181, %162, %130 : vector<16x128xi1>, vector<16x128xf32>
    %185 = arith.select %181, %160, %131 : vector<16x128xi1>, vector<16x128xf32>
    %186 = arith.select %183, %179, %132 : vector<16x128xi1>, vector<16x128xf32>
    %187 = arith.select %183, %177, %133 : vector<16x128xi1>, vector<16x128xf32>
    %c48_78 = arith.constant 48 : index
    %c0_79 = arith.constant 0 : index
    %188 = vector.load %arg10[%c48_78, %c0_79] : memref<96x128xbf16, #tpu.memory_space<vmem>>, vector<16x128xbf16>
    %189 = arith.extf %188 : vector<16x128xbf16> to vector<16x128xf32>
    %190 = arith.truncf %184 : vector<16x128xf32> to vector<16x128xbf16>
    %c0_80 = arith.constant 0 : index
    %c0_81 = arith.constant 0 : index
    %191 = vector.load %arg7[%c0_80, %c0_81] : memref<128x128xbf16, #tpu.memory_space<vmem>>, vector<128x128xbf16>
    %cst_82 = arith.constant dense<0.000000e+00> : vector<16x128xf32>
    %192 = tpu.matmul %190, %191, %cst_82 {dimension_numbers = #tpu.dot_dimension_numbers<[1], [0], [0], [1], [0, 0, 1, 1], [], []>} : vector<16x128xbf16>, vector<128x128xbf16>, vector<16x128xf32> -> vector<16x128xf32>
    %193 = arith.addf %189, %192 : vector<16x128xf32>
    %c32_83 = arith.constant 32 : index
    %c0_84 = arith.constant 0 : index
    %194 = vector.load %arg11[%c32_83, %c0_84] : memref<96x128xbf16, #tpu.memory_space<vmem>>, vector<16x128xbf16>
    %195 = arith.extf %194 : vector<16x128xbf16> to vector<16x128xf32>
    %196 = arith.truncf %186 : vector<16x128xf32> to vector<16x128xbf16>
    %c0_85 = arith.constant 0 : index
    %c0_86 = arith.constant 0 : index
    %197 = vector.load %arg8[%c0_85, %c0_86] : memref<128x128xbf16, #tpu.memory_space<vmem>>, vector<128x128xbf16>
    %cst_87 = arith.constant dense<0.000000e+00> : vector<16x128xf32>
    %198 = tpu.matmul %196, %197, %cst_87 {dimension_numbers = #tpu.dot_dimension_numbers<[1], [0], [0], [1], [0, 0, 1, 1], [], []>} : vector<16x128xbf16>, vector<128x128xbf16>, vector<16x128xf32> -> vector<16x128xf32>
    %199 = arith.addf %195, %198 : vector<16x128xf32>
    %cst_88 = arith.constant 5.000000e-01 : f32
    %200 = vector.broadcast %cst_88 : f32 to vector<16x128xf32>
    %201 = arith.mulf %200, %193 : vector<16x128xf32>
    %202 = math.tanh %201 : vector<16x128xf32>
    %cst_89 = arith.constant 1.000000e+00 : f32
    %203 = vector.broadcast %cst_89 : f32 to vector<16x128xf32>
    %204 = arith.addf %202, %203 : vector<16x128xf32>
    %cst_90 = arith.constant 5.000000e-01 : f32
    %205 = vector.broadcast %cst_90 : f32 to vector<16x128xf32>
    %206 = arith.mulf %205, %204 : vector<16x128xf32>
    %207 = math.tanh %193 : vector<16x128xf32>
    %208 = arith.select %24, %207, %206 : vector<16x128xi1>, vector<16x128xf32>
    %c96_i32_91 = arith.constant 96 : i32
    %209 = tpu.dynamic_rotate %208 by %c96_i32_91 dim 1 : vector<16x128xf32>, i32 -> vector<16x128xf32>
    %c64_i32_92 = arith.constant 64 : i32
    %210 = tpu.dynamic_rotate %208 by %c64_i32_92 dim 1 : vector<16x128xf32>, i32 -> vector<16x128xf32>
    %c32_i32_93 = arith.constant 32 : i32
    %211 = tpu.dynamic_rotate %208 by %c32_i32_93 dim 1 : vector<16x128xf32>, i32 -> vector<16x128xf32>
    %212 = arith.mulf %209, %185 : vector<16x128xf32>
    %213 = arith.mulf %208, %210 : vector<16x128xf32>
    %214 = arith.addf %212, %213 : vector<16x128xf32>
    %215 = math.tanh %214 : vector<16x128xf32>
    %216 = arith.mulf %211, %215 : vector<16x128xf32>
    %cst_94 = arith.constant 5.000000e-01 : f32
    %217 = vector.broadcast %cst_94 : f32 to vector<16x128xf32>
    %218 = arith.mulf %217, %199 : vector<16x128xf32>
    %219 = math.tanh %218 : vector<16x128xf32>
    %cst_95 = arith.constant 1.000000e+00 : f32
    %220 = vector.broadcast %cst_95 : f32 to vector<16x128xf32>
    %221 = arith.addf %219, %220 : vector<16x128xf32>
    %cst_96 = arith.constant 5.000000e-01 : f32
    %222 = vector.broadcast %cst_96 : f32 to vector<16x128xf32>
    %223 = arith.mulf %222, %221 : vector<16x128xf32>
    %224 = math.tanh %199 : vector<16x128xf32>
    %225 = arith.select %24, %224, %223 : vector<16x128xi1>, vector<16x128xf32>
    %c96_i32_97 = arith.constant 96 : i32
    %226 = tpu.dynamic_rotate %225 by %c96_i32_97 dim 1 : vector<16x128xf32>, i32 -> vector<16x128xf32>
    %c64_i32_98 = arith.constant 64 : i32
    %227 = tpu.dynamic_rotate %225 by %c64_i32_98 dim 1 : vector<16x128xf32>, i32 -> vector<16x128xf32>
    %c32_i32_99 = arith.constant 32 : i32
    %228 = tpu.dynamic_rotate %225 by %c32_i32_99 dim 1 : vector<16x128xf32>, i32 -> vector<16x128xf32>
    %229 = arith.mulf %226, %187 : vector<16x128xf32>
    %230 = arith.mulf %225, %227 : vector<16x128xf32>
    %231 = arith.addf %229, %230 : vector<16x128xf32>
    %232 = math.tanh %231 : vector<16x128xf32>
    %233 = arith.mulf %228, %232 : vector<16x128xf32>
    %c3_i32_100 = arith.constant 3 : i32
    %234 = vector.broadcast %c3_i32_100 : i32 to vector<16x128xi32>
    %235 = arith.cmpi sgt, %18, %234 : vector<16x128xi32>
    %c2_i32_101 = arith.constant 2 : i32
    %236 = vector.broadcast %c2_i32_101 : i32 to vector<16x128xi32>
    %237 = arith.cmpi sgt, %18, %236 : vector<16x128xi32>
    %238 = arith.select %235, %216, %184 : vector<16x128xi1>, vector<16x128xf32>
    %239 = arith.select %235, %214, %185 : vector<16x128xi1>, vector<16x128xf32>
    %240 = arith.select %237, %233, %186 : vector<16x128xi1>, vector<16x128xf32>
    %241 = arith.select %237, %231, %187 : vector<16x128xi1>, vector<16x128xf32>
    %c64_102 = arith.constant 64 : index
    %c0_103 = arith.constant 0 : index
    %242 = vector.load %arg10[%c64_102, %c0_103] : memref<96x128xbf16, #tpu.memory_space<vmem>>, vector<16x128xbf16>
    %243 = arith.extf %242 : vector<16x128xbf16> to vector<16x128xf32>
    %244 = arith.truncf %238 : vector<16x128xf32> to vector<16x128xbf16>
    %c0_104 = arith.constant 0 : index
    %c0_105 = arith.constant 0 : index
    %245 = vector.load %arg7[%c0_104, %c0_105] : memref<128x128xbf16, #tpu.memory_space<vmem>>, vector<128x128xbf16>
    %cst_106 = arith.constant dense<0.000000e+00> : vector<16x128xf32>
    %246 = tpu.matmul %244, %245, %cst_106 {dimension_numbers = #tpu.dot_dimension_numbers<[1], [0], [0], [1], [0, 0, 1, 1], [], []>} : vector<16x128xbf16>, vector<128x128xbf16>, vector<16x128xf32> -> vector<16x128xf32>
    %247 = arith.addf %243, %246 : vector<16x128xf32>
    %c16_107 = arith.constant 16 : index
    %c0_108 = arith.constant 0 : index
    %248 = vector.load %arg11[%c16_107, %c0_108] : memref<96x128xbf16, #tpu.memory_space<vmem>>, vector<16x128xbf16>
    %249 = arith.extf %248 : vector<16x128xbf16> to vector<16x128xf32>
    %250 = arith.truncf %240 : vector<16x128xf32> to vector<16x128xbf16>
    %c0_109 = arith.constant 0 : index
    %c0_110 = arith.constant 0 : index
    %251 = vector.load %arg8[%c0_109, %c0_110] : memref<128x128xbf16, #tpu.memory_space<vmem>>, vector<128x128xbf16>
    %cst_111 = arith.constant dense<0.000000e+00> : vector<16x128xf32>
    %252 = tpu.matmul %250, %251, %cst_111 {dimension_numbers = #tpu.dot_dimension_numbers<[1], [0], [0], [1], [0, 0, 1, 1], [], []>} : vector<16x128xbf16>, vector<128x128xbf16>, vector<16x128xf32> -> vector<16x128xf32>
    %253 = arith.addf %249, %252 : vector<16x128xf32>
    %cst_112 = arith.constant 5.000000e-01 : f32
    %254 = vector.broadcast %cst_112 : f32 to vector<16x128xf32>
    %255 = arith.mulf %254, %247 : vector<16x128xf32>
    %256 = math.tanh %255 : vector<16x128xf32>
    %cst_113 = arith.constant 1.000000e+00 : f32
    %257 = vector.broadcast %cst_113 : f32 to vector<16x128xf32>
    %258 = arith.addf %256, %257 : vector<16x128xf32>
    %cst_114 = arith.constant 5.000000e-01 : f32
    %259 = vector.broadcast %cst_114 : f32 to vector<16x128xf32>
    %260 = arith.mulf %259, %258 : vector<16x128xf32>
    %261 = math.tanh %247 : vector<16x128xf32>
    %262 = arith.select %24, %261, %260 : vector<16x128xi1>, vector<16x128xf32>
    %c96_i32_115 = arith.constant 96 : i32
    %263 = tpu.dynamic_rotate %262 by %c96_i32_115 dim 1 : vector<16x128xf32>, i32 -> vector<16x128xf32>
    %c64_i32_116 = arith.constant 64 : i32
    %264 = tpu.dynamic_rotate %262 by %c64_i32_116 dim 1 : vector<16x128xf32>, i32 -> vector<16x128xf32>
    %c32_i32_117 = arith.constant 32 : i32
    %265 = tpu.dynamic_rotate %262 by %c32_i32_117 dim 1 : vector<16x128xf32>, i32 -> vector<16x128xf32>
    %266 = arith.mulf %263, %239 : vector<16x128xf32>
    %267 = arith.mulf %262, %264 : vector<16x128xf32>
    %268 = arith.addf %266, %267 : vector<16x128xf32>
    %269 = math.tanh %268 : vector<16x128xf32>
    %270 = arith.mulf %265, %269 : vector<16x128xf32>
    %cst_118 = arith.constant 5.000000e-01 : f32
    %271 = vector.broadcast %cst_118 : f32 to vector<16x128xf32>
    %272 = arith.mulf %271, %253 : vector<16x128xf32>
    %273 = math.tanh %272 : vector<16x128xf32>
    %cst_119 = arith.constant 1.000000e+00 : f32
    %274 = vector.broadcast %cst_119 : f32 to vector<16x128xf32>
    %275 = arith.addf %273, %274 : vector<16x128xf32>
    %cst_120 = arith.constant 5.000000e-01 : f32
    %276 = vector.broadcast %cst_120 : f32 to vector<16x128xf32>
    %277 = arith.mulf %276, %275 : vector<16x128xf32>
    %278 = math.tanh %253 : vector<16x128xf32>
    %279 = arith.select %24, %278, %277 : vector<16x128xi1>, vector<16x128xf32>
    %c96_i32_121 = arith.constant 96 : i32
    %280 = tpu.dynamic_rotate %279 by %c96_i32_121 dim 1 : vector<16x128xf32>, i32 -> vector<16x128xf32>
    %c64_i32_122 = arith.constant 64 : i32
    %281 = tpu.dynamic_rotate %279 by %c64_i32_122 dim 1 : vector<16x128xf32>, i32 -> vector<16x128xf32>
    %c32_i32_123 = arith.constant 32 : i32
    %282 = tpu.dynamic_rotate %279 by %c32_i32_123 dim 1 : vector<16x128xf32>, i32 -> vector<16x128xf32>
    %283 = arith.mulf %280, %241 : vector<16x128xf32>
    %284 = arith.mulf %279, %281 : vector<16x128xf32>
    %285 = arith.addf %283, %284 : vector<16x128xf32>
    %286 = math.tanh %285 : vector<16x128xf32>
    %287 = arith.mulf %282, %286 : vector<16x128xf32>
    %c4_i32_124 = arith.constant 4 : i32
    %288 = vector.broadcast %c4_i32_124 : i32 to vector<16x128xi32>
    %289 = arith.cmpi sgt, %18, %288 : vector<16x128xi32>
    %c1_i32_125 = arith.constant 1 : i32
    %290 = vector.broadcast %c1_i32_125 : i32 to vector<16x128xi32>
    %291 = arith.cmpi sgt, %18, %290 : vector<16x128xi32>
    %292 = arith.select %289, %270, %238 : vector<16x128xi1>, vector<16x128xf32>
    %293 = arith.select %289, %268, %239 : vector<16x128xi1>, vector<16x128xf32>
    %294 = arith.select %291, %287, %240 : vector<16x128xi1>, vector<16x128xf32>
    %295 = arith.select %291, %285, %241 : vector<16x128xi1>, vector<16x128xf32>
    %c80_126 = arith.constant 80 : index
    %c0_127 = arith.constant 0 : index
    %296 = vector.load %arg10[%c80_126, %c0_127] : memref<96x128xbf16, #tpu.memory_space<vmem>>, vector<16x128xbf16>
    %297 = arith.extf %296 : vector<16x128xbf16> to vector<16x128xf32>
    %298 = arith.truncf %292 : vector<16x128xf32> to vector<16x128xbf16>
    %c0_128 = arith.constant 0 : index
    %c0_129 = arith.constant 0 : index
    %299 = vector.load %arg7[%c0_128, %c0_129] : memref<128x128xbf16, #tpu.memory_space<vmem>>, vector<128x128xbf16>
    %cst_130 = arith.constant dense<0.000000e+00> : vector<16x128xf32>
    %300 = tpu.matmul %298, %299, %cst_130 {dimension_numbers = #tpu.dot_dimension_numbers<[1], [0], [0], [1], [0, 0, 1, 1], [], []>} : vector<16x128xbf16>, vector<128x128xbf16>, vector<16x128xf32> -> vector<16x128xf32>
    %301 = arith.addf %297, %300 : vector<16x128xf32>
    %c0_131 = arith.constant 0 : index
    %c0_132 = arith.constant 0 : index
    %302 = vector.load %arg11[%c0_131, %c0_132] : memref<96x128xbf16, #tpu.memory_space<vmem>>, vector<16x128xbf16>
    %303 = arith.extf %302 : vector<16x128xbf16> to vector<16x128xf32>
    %304 = arith.truncf %294 : vector<16x128xf32> to vector<16x128xbf16>
    %c0_133 = arith.constant 0 : index
    %c0_134 = arith.constant 0 : index
    %305 = vector.load %arg8[%c0_133, %c0_134] : memref<128x128xbf16, #tpu.memory_space<vmem>>, vector<128x128xbf16>
    %cst_135 = arith.constant dense<0.000000e+00> : vector<16x128xf32>
    %306 = tpu.matmul %304, %305, %cst_135 {dimension_numbers = #tpu.dot_dimension_numbers<[1], [0], [0], [1], [0, 0, 1, 1], [], []>} : vector<16x128xbf16>, vector<128x128xbf16>, vector<16x128xf32> -> vector<16x128xf32>
    %307 = arith.addf %303, %306 : vector<16x128xf32>
    %cst_136 = arith.constant 5.000000e-01 : f32
    %308 = vector.broadcast %cst_136 : f32 to vector<16x128xf32>
    %309 = arith.mulf %308, %301 : vector<16x128xf32>
    %310 = math.tanh %309 : vector<16x128xf32>
    %cst_137 = arith.constant 1.000000e+00 : f32
    %311 = vector.broadcast %cst_137 : f32 to vector<16x128xf32>
    %312 = arith.addf %310, %311 : vector<16x128xf32>
    %cst_138 = arith.constant 5.000000e-01 : f32
    %313 = vector.broadcast %cst_138 : f32 to vector<16x128xf32>
    %314 = arith.mulf %313, %312 : vector<16x128xf32>
    %315 = math.tanh %301 : vector<16x128xf32>
    %316 = arith.select %24, %315, %314 : vector<16x128xi1>, vector<16x128xf32>
    %c96_i32_139 = arith.constant 96 : i32
    %317 = tpu.dynamic_rotate %316 by %c96_i32_139 dim 1 : vector<16x128xf32>, i32 -> vector<16x128xf32>
    %c64_i32_140 = arith.constant 64 : i32
    %318 = tpu.dynamic_rotate %316 by %c64_i32_140 dim 1 : vector<16x128xf32>, i32 -> vector<16x128xf32>
    %c32_i32_141 = arith.constant 32 : i32
    %319 = tpu.dynamic_rotate %316 by %c32_i32_141 dim 1 : vector<16x128xf32>, i32 -> vector<16x128xf32>
    %320 = arith.mulf %317, %293 : vector<16x128xf32>
    %321 = arith.mulf %316, %318 : vector<16x128xf32>
    %322 = arith.addf %320, %321 : vector<16x128xf32>
    %323 = math.tanh %322 : vector<16x128xf32>
    %324 = arith.mulf %319, %323 : vector<16x128xf32>
    %cst_142 = arith.constant 5.000000e-01 : f32
    %325 = vector.broadcast %cst_142 : f32 to vector<16x128xf32>
    %326 = arith.mulf %325, %307 : vector<16x128xf32>
    %327 = math.tanh %326 : vector<16x128xf32>
    %cst_143 = arith.constant 1.000000e+00 : f32
    %328 = vector.broadcast %cst_143 : f32 to vector<16x128xf32>
    %329 = arith.addf %327, %328 : vector<16x128xf32>
    %cst_144 = arith.constant 5.000000e-01 : f32
    %330 = vector.broadcast %cst_144 : f32 to vector<16x128xf32>
    %331 = arith.mulf %330, %329 : vector<16x128xf32>
    %332 = math.tanh %307 : vector<16x128xf32>
    %333 = arith.select %24, %332, %331 : vector<16x128xi1>, vector<16x128xf32>
    %c96_i32_145 = arith.constant 96 : i32
    %334 = tpu.dynamic_rotate %333 by %c96_i32_145 dim 1 : vector<16x128xf32>, i32 -> vector<16x128xf32>
    %c64_i32_146 = arith.constant 64 : i32
    %335 = tpu.dynamic_rotate %333 by %c64_i32_146 dim 1 : vector<16x128xf32>, i32 -> vector<16x128xf32>
    %c32_i32_147 = arith.constant 32 : i32
    %336 = tpu.dynamic_rotate %333 by %c32_i32_147 dim 1 : vector<16x128xf32>, i32 -> vector<16x128xf32>
    %337 = arith.mulf %334, %295 : vector<16x128xf32>
    %338 = arith.mulf %333, %335 : vector<16x128xf32>
    %339 = arith.addf %337, %338 : vector<16x128xf32>
    %340 = math.tanh %339 : vector<16x128xf32>
    %341 = arith.mulf %336, %340 : vector<16x128xf32>
    %c5_i32_148 = arith.constant 5 : i32
    %342 = vector.broadcast %c5_i32_148 : i32 to vector<16x128xi32>
    %343 = arith.cmpi sgt, %18, %342 : vector<16x128xi32>
    %c0_i32_149 = arith.constant 0 : i32
    %344 = vector.broadcast %c0_i32_149 : i32 to vector<16x128xi32>
    %345 = arith.cmpi sgt, %18, %344 : vector<16x128xi32>
    %346 = arith.select %343, %324, %292 : vector<16x128xi1>, vector<16x128xf32>
    %347 = arith.select %345, %341, %294 : vector<16x128xi1>, vector<16x128xf32>
    %348 = arith.addf %346, %347 : vector<16x128xf32>
    %cst_150 = arith.constant 5.000000e-01 : f32
    %349 = vector.broadcast %cst_150 : f32 to vector<16x128xf32>
    %350 = arith.mulf %349, %348 : vector<16x128xf32>
    %c0_151 = arith.constant 0 : index
    %c0_152 = arith.constant 0 : index
    %351 = vector.load %arg9[%c0_151, %c0_152] : memref<16x128xf32, #tpu.memory_space<vmem>>, vector<16x128xf32>
    tpu.vector_store %arg9[%c0_151, %c0_152], %350 {strides = array<i32>} : memref<16x128xf32, #tpu.memory_space<vmem>>, vector<16x128xf32>,
    return
  }
  func.func @transform_0(%arg0: i32) -> (i32, i32, i32) {
    %c0_i32 = arith.constant 0 : i32
    %c0_i32_0 = arith.constant 0 : i32
    %c0_i32_1 = arith.constant 0 : i32
    return %c0_i32, %arg0, %c0_i32_0 : i32, i32, i32
  }
  func.func @transform_1(%arg0: i32) -> (i32, i32) {
    %c0_i32 = arith.constant 0 : i32
    %c0_i32_0 = arith.constant 0 : i32
    return %arg0, %c0_i32 : i32, i32
  }
  func.func @transform_2(%arg0: i32) -> (i32, i32) {
    %c0_i32 = arith.constant 0 : i32
    %c0_i32_0 = arith.constant 0 : i32
    %c0_i32_1 = arith.constant 0 : i32
    return %c0_i32, %c0_i32_0 : i32, i32
  }
  func.func @transform_3(%arg0: i32) -> (i32, i32) {
    %c0_i32 = arith.constant 0 : i32
    %c0_i32_0 = arith.constant 0 : i32
    %c0_i32_1 = arith.constant 0 : i32
    return %c0_i32, %c0_i32_0 : i32, i32
  }
  func.func @transform_4(%arg0: i32) -> (i32, i32) {
    %c0_i32 = arith.constant 0 : i32
    %c0_i32_0 = arith.constant 0 : i32
    %c0_i32_1 = arith.constant 0 : i32
    return %c0_i32, %c0_i32_0 : i32, i32
  }
  func.func @transform_5(%arg0: i32) -> (i32, i32) {
    %c0_i32 = arith.constant 0 : i32
    %c0_i32_0 = arith.constant 0 : i32
    %c0_i32_1 = arith.constant 0 : i32
    return %c0_i32, %c0_i32_0 : i32, i32
  }
  func.func @transform_6(%arg0: i32) -> (i32, i32) {
    %c0_i32 = arith.constant 0 : i32
    %c0_i32_0 = arith.constant 0 : i32
    %c0_i32_1 = arith.constant 0 : i32
    return %c0_i32, %c0_i32_0 : i32, i32
  }
  func.func @transform_7(%arg0: i32) -> (i32, i32) {
    %c0_i32 = arith.constant 0 : i32
    %c0_i32_0 = arith.constant 0 : i32
    %c0_i32_1 = arith.constant 0 : i32
    return %c0_i32, %c0_i32_0 : i32, i32
  }
  func.func @transform_8(%arg0: i32) -> (i32, i32) {
    %c0_i32 = arith.constant 0 : i32
    %c0_i32_0 = arith.constant 0 : i32
    return %arg0, %c0_i32 : i32, i32
  }
}

</mosaic_0001>

<llo_original>
// kernel: tpu_custom_call.1
$region0: #{tpu_custom_call.1}
  #allocation0 [shape = 'u32[]', space=smem, size = 0x4, offset = 0x4, fixed_abs, tag = 'smem constant byte address 0x4 - core index']
  #allocation1 [shape = 'u32[72,128]{1,0:T(1,128)}', space=vmem, size = 0x9000, scoped, tag = 'internal scratch']
  #allocation2 [shape = 'bf16[96,128]{1,0:T(8,128)(2,1)}', space=vmem, size = 0x6000, scoped, tag = 'scratch operand']
  #allocation3 [shape = 'bf16[96,128]{1,0:T(8,128)(2,1)}', space=vmem, size = 0x6000, scoped, tag = 'scratch operand']
  %s0 = inlined_call_operand.hbm [shape: bf16[6,16,128], index: 0, kind: input, shape index: {}]
  %s1 = inlined_call_operand.vmem [shape: s32[16,1], index: 1, kind: input, shape index: {}]
  %s2 = inlined_call_operand.hbm [shape: bf16[128,128], index: 2, kind: input, shape index: {}]
  %s3 = inlined_call_operand.hbm [shape: bf16[128,128], index: 3, kind: input, shape index: {}]
  %s4 = inlined_call_operand.vmem [shape: f32[1,128], index: 4, kind: input, shape index: {}]
  %s5 = inlined_call_operand.vmem [shape: f32[1,128], index: 5, kind: input, shape index: {}]
  %s6 = inlined_call_operand.hbm [shape: bf16[128,128], index: 6, kind: input, shape index: {}]
  %s7 = inlined_call_operand.hbm [shape: bf16[128,128], index: 7, kind: input, shape index: {}]
  %s8 = inlined_call_operand.hbm [shape: f32[16,128], index: 8, kind: output, shape index: {}]
  %s9 = sld [smem:[#allocation0]]
  $region62: #{tpu_custom_call.1} parent=0
    _
  %s11 = ssub.s32 1, %s9
  %s12 = scalar_select 0, %s11, %s9
  $region1: #{tpu_custom_call.1} parent=0
    #allocation4 [shape = 'u8[24576]{0}', space=vmem, size = 0x6000, scoped, tag = 'input window, operand 0, single buffered']
    #allocation5 [shape = 's32[1]{0}', space=sflag, size = 0x4, scoped, tag = 'scoped memory for tpu_custom_call.1']
    #allocation6 [shape = 's32[1]{0}', space=sflag, size = 0x4, scoped, tag = 'scoped memory for tpu_custom_call.1']
    #allocation7 [shape = 'u8[32768]{0}', space=vmem, size = 0x8000, scoped, tag = 'input window, operand 2, single buffered']
    #allocation8 [shape = 's32[1]{0}', space=sflag, size = 0x4, scoped, tag = 'scoped memory for tpu_custom_call.1']
    #allocation9 [shape = 'u8[32768]{0}', space=vmem, size = 0x8000, scoped, tag = 'input window, operand 3, single buffered']
    #allocation10 [shape = 'u8[32768]{0}', space=vmem, size = 0x8000, scoped, tag = 'input window, operand 6, single buffered']
    #allocation11 [shape = 's32[1]{0}', space=sflag, size = 0x4, scoped, tag = 'scoped memory for tpu_custom_call.1']
    #allocation12 [shape = 'u8[32768]{0}', space=vmem, size = 0x8000, scoped, tag = 'input window, operand 7, single buffered']
    #allocation13 [shape = 'u8[8192]{0}', space=vmem, size = 0x2000, scoped, tag = 'output window, operand 0, single buffered']
    %13 = vsyncpa [#allocation5], 0
    %14 = vsyncpa [#allocation8], 0
    %15 = vsyncpa [#allocation11], 0
    %16 = vsyncpa [#allocation6], 0
    // Predicated region
    $region2: #{tpu_custom_call.1} parent=1 // pred_check
      _
    $region3: #{tpu_custom_call.1} parent=1 // pred_check_branch
      %18 = sbr.rel (0) target = $region5
    $region4: #{tpu_custom_call.1} parent=1 // pred_region
      %20 = vsyncadd [#allocation5], 0
      %s21 = sshll.u32 %s0, 4
      %s22 = int_to_ptr.hbm [resolvable:$true] %s21
      %s23 = sshll.u32 [#allocation4], 4
      %s24 = int_to_ptr.vmem [resolvable:$true] %s23
      %29 = dma.hbm_to_vmem [thread:$0]  %s22, 768, %s24, [#allocation5], 64, 64, 4
    $region5: #{tpu_custom_call.1} parent=1 // pred_fallthru
      _
    // Predicated region
    $region6: #{tpu_custom_call.1} parent=1 // pred_check
      _
    $region7: #{tpu_custom_call.1} parent=1 // pred_check_branch
      %31 = sbr.rel (0) target = $region9
    $region8: #{tpu_custom_call.1} parent=1 // pred_region
      _
    $region9: #{tpu_custom_call.1} parent=1 // pred_fallthru
      _
    // Predicated region
    $region10: #{tpu_custom_call.1} parent=1 // pred_check
      _
    $region11: #{tpu_custom_call.1} parent=1 // pred_check_branch
      %33 = sbr.rel (0) target = $region13
    $region12: #{tpu_custom_call.1} parent=1 // pred_region
      %35 = vsyncadd [#allocation8], 0
      %s36 = sshll.u32 %s2, 4
      %s37 = int_to_ptr.hbm [resolvable:$true] %s36
      %s38 = sshll.u32 [#allocation7], 4
      %s39 = int_to_ptr.vmem [resolvable:$true] %s38
      %44 = dma.hbm_to_vmem [thread:$0]  %s37, 1024, %s39, [#allocation8], 64, 64, 4
    $region13: #{tpu_custom_call.1} parent=1 // pred_fallthru
      _
    // Predicated region
    $region14: #{tpu_custom_call.1} parent=1 // pred_check
      _
    $region15: #{tpu_custom_call.1} parent=1 // pred_check_branch
      %46 = sbr.rel (0) target = $region17
    $region16: #{tpu_custom_call.1} parent=1 // pred_region
      %48 = vsyncadd [#allocation8], 0
      %s49 = sshll.u32 %s3, 4
      %s50 = int_to_ptr.hbm [resolvable:$true] %s49
      %s51 = sshll.u32 [#allocation9], 4
      %s52 = int_to_ptr.vmem [resolvable:$true] %s51
      %57 = dma.hbm_to_vmem [thread:$0]  %s50, 1024, %s52, [#allocation8], 64, 64, 4
    $region17: #{tpu_custom_call.1} parent=1 // pred_fallthru
      _
    // Predicated region
    $region18: #{tpu_custom_call.1} parent=1 // pred_check
      _
    $region19: #{tpu_custom_call.1} parent=1 // pred_check_branch
      %59 = sbr.rel (0) target = $region21
    $region20: #{tpu_custom_call.1} parent=1 // pred_region
      _
    $region21: #{tpu_custom_call.1} parent=1 // pred_fallthru
      _
    // Predicated region
    $region22: #{tpu_custom_call.1} parent=1 // pred_check
      _
    $region23: #{tpu_custom_call.1} parent=1 // pred_check_branch
      %61 = sbr.rel (0) target = $region25
    $region24: #{tpu_custom_call.1} parent=1 // pred_region
      _
    $region25: #{tpu_custom_call.1} parent=1 // pred_fallthru
      _
    // Predicated region
    $region26: #{tpu_custom_call.1} parent=1 // pred_check
      _
    $region27: #{tpu_custom_call.1} parent=1 // pred_check_branch
      %63 = sbr.rel (0) target = $region29
    $region28: #{tpu_custom_call.1} parent=1 // pred_region
      %65 = vsyncadd [#allocation11], 0
      %s66 = sshll.u32 %s6, 4
      %s67 = int_to_ptr.hbm [resolvable:$true] %s66
      %s68 = sshll.u32 [#allocation10], 4
      %s69 = int_to_ptr.vmem [resolvable:$true] %s68
      %74 = dma.hbm_to_vmem [thread:$0]  %s67, 1024, %s69, [#allocation11], 64, 64, 4
    $region29: #{tpu_custom_call.1} parent=1 // pred_fallthru
      _
    // Predicated region
    $region30: #{tpu_custom_call.1} parent=1 // pred_check
      _
    $region31: #{tpu_custom_call.1} parent=1 // pred_check_branch
      %76 = sbr.rel (0) target = $region33
    $region32: #{tpu_custom_call.1} parent=1 // pred_region
      %78 = vsyncadd [#allocation11], 0
      %s79 = sshll.u32 %s7, 4
      %s80 = int_to_ptr.hbm [resolvable:$true] %s79
      %s81 = sshll.u32 [#allocation12], 4
      %s82 = int_to_ptr.vmem [resolvable:$true] %s81
      %87 = dma.hbm_to_vmem [thread:$0]  %s80, 1024, %s82, [#allocation11], 64, 64, 4
    $region33: #{tpu_custom_call.1} parent=1 // pred_fallthru
      _
    // Predicated region
    $region34: #{tpu_custom_call.1} parent=1 // pred_check
      _
    $region35: #{tpu_custom_call.1} parent=1 // pred_check_branch
      %89 = sbr.rel (0) target = $region37
    $region36: #{tpu_custom_call.1} parent=1 // pred_region
      %91 = dma.done [#allocation5], 768
    $region37: #{tpu_custom_call.1} parent=1 // pred_fallthru
      _
    // Predicated region
    $region38: #{tpu_custom_call.1} parent=1 // pred_check
      _
    $region39: #{tpu_custom_call.1} parent=1 // pred_check_branch
      %93 = sbr.rel (0) target = $region41
    $region40: #{tpu_custom_call.1} parent=1 // pred_region
      %95 = dma.done [#allocation8], 1024
    $region41: #{tpu_custom_call.1} parent=1 // pred_fallthru
      _
    // Predicated region
    $region42: #{tpu_custom_call.1} parent=1 // pred_check
      _
    $region43: #{tpu_custom_call.1} parent=1 // pred_check_branch
      %97 = sbr.rel (0) target = $region45
    $region44: #{tpu_custom_call.1} parent=1 // pred_region
      %99 = dma.done [#allocation8], 1024
    $region45: #{tpu_custom_call.1} parent=1 // pred_fallthru
      _
    // Predicated region
    $region46: #{tpu_custom_call.1} parent=1 // pred_check
      _
    $region47: #{tpu_custom_call.1} parent=1 // pred_check_branch
      %101 = sbr.rel (0) target = $region49
    $region48: #{tpu_custom_call.1} parent=1 // pred_region
      %103 = dma.done [#allocation11], 1024
    $region49: #{tpu_custom_call.1} parent=1 // pred_fallthru
      _
    // Predicated region
    $region50: #{tpu_custom_call.1} parent=1 // pred_check
      _
    $region51: #{tpu_custom_call.1} parent=1 // pred_check_branch
      %105 = sbr.rel (0) target = $region53
    $region52: #{tpu_custom_call.1} parent=1 // pred_region
      %107 = dma.done [#allocation11], 1024
    $region53: #{tpu_custom_call.1} parent=1 // pred_fallthru
      _
    %v109 = vld [vmem:[#allocation4] sm:$0xf]
    %v110 = vld [vmem:[#allocation4 + $0x4] sm:$0xf]
    %v111 = vld [vmem:[#allocation4 + $0x8] sm:$0xf]
    %v112 = vld [vmem:[#allocation4 + $0xc] sm:$0xf]
    %v113 = vld [vmem:[#allocation4 + $0x10] sm:$0xf]
    %v114 = vld [vmem:[#allocation4 + $0x14] sm:$0xf]
    %v115 = vld [vmem:[#allocation4 + $0x18] sm:$0xf]
    %v116 = vld [vmem:[#allocation4 + $0x1c] sm:$0xf]
    %v117 = vld [vmem:[#allocation4 + $0x20] sm:$0xf]
    %v118 = vld [vmem:[#allocation4 + $0x24] sm:$0xf]
    %v119 = vld [vmem:[#allocation4 + $0x28] sm:$0xf]
    %v120 = vld [vmem:[#allocation4 + $0x2c] sm:$0xf]
    %v121 = vld [vmem:[#allocation7] sm:$0xf]
    %v122 = vld [vmem:[#allocation7 + $0x4] sm:$0xf]
    %v123 = vld [vmem:[#allocation7 + $0x8] sm:$0xf]
    %v124 = vld [vmem:[#allocation7 + $0xc] sm:$0xf]
    %v125 = vld [vmem:[#allocation7 + $0x10] sm:$0xf]
    %v126 = vld [vmem:[#allocation7 + $0x14] sm:$0xf]
    %v127 = vld [vmem:[#allocation7 + $0x18] sm:$0xf]
    %v128 = vld [vmem:[#allocation7 + $0x1c] sm:$0xf]
    %v129 = vld [vmem:[#allocation7 + $0x20] sm:$0xf]
    %v130 = vld [vmem:[#allocation7 + $0x24] sm:$0xf]
    %v131 = vld [vmem:[#allocation7 + $0x28] sm:$0xf]
    %v132 = vld [vmem:[#allocation7 + $0x2c] sm:$0xf]
    %v133 = vld [vmem:[#allocation7 + $0x30] sm:$0xf]
    %v134 = vld [vmem:[#allocation7 + $0x34] sm:$0xf]
    %v135 = vld [vmem:[#allocation7 + $0x38] sm:$0xf]
    %v136 = vld [vmem:[#allocation7 + $0x3c] sm:$0xf]
    %v137 = vld [vmem:[%s4] sm:$0x1]
    %v139 = vperm.slane %v137, 0
    %v153 = vunpack.c.l.b16 %v109
    %v154 = vunpack.c.l.b16 %v110
    %v155 = vunpack.c.l.b16 %v111
    %v156 = vunpack.c.l.b16 %v112
    %v157 = vunpack.c.l.b16 %v113
    %v158 = vunpack.c.l.b16 %v114
    %v159 = vunpack.c.l.b16 %v115
    %v160 = vunpack.c.l.b16 %v116
    %v161 = vunpack.c.l.b16 %v117
    %v162 = vunpack.c.l.b16 %v118
    %v163 = vunpack.c.l.b16 %v119
    %v164 = vunpack.c.l.b16 %v120
    %v165 = vpack.c.b16 %v154, %v153
    %v166 = vpack.c.b16 %v156, %v155
    %v167 = vpack.c.b16 %v158, %v157
    %v168 = vpack.c.b16 %v160, %v159
    %v169 = vpack.c.b16 %v162, %v161
    %v170 = vpack.c.b16 %v164, %v163
    %v193 = vunpack.c.l.b16 %v121
    %v194 = vunpack.c.l.b16 %v122
    %v195 = vunpack.c.l.b16 %v123
    %v196 = vunpack.c.l.b16 %v124
    %v197 = vunpack.c.l.b16 %v125
    %v198 = vunpack.c.l.b16 %v126
    %v199 = vunpack.c.l.b16 %v127
    %v200 = vunpack.c.l.b16 %v128
    %v201 = vunpack.c.l.b16 %v129
    %v202 = vunpack.c.l.b16 %v130
    %v203 = vunpack.c.l.b16 %v131
    %v204 = vunpack.c.l.b16 %v132
    %v205 = vunpack.c.l.b16 %v133
    %v206 = vunpack.c.l.b16 %v134
    %v207 = vunpack.c.l.b16 %v135
    %v208 = vunpack.c.l.b16 %v136
    %v209 = vpack.c.b16 %v194, %v193
    %v210 = vpack.c.b16 %v196, %v195
    %v211 = vpack.c.b16 %v198, %v197
    %v212 = vpack.c.b16 %v200, %v199
    %v213 = vpack.c.b16 %v202, %v201
    %v214 = vpack.c.b16 %v204, %v203
    %v215 = vpack.c.b16 %v206, %v205
    %v216 = vpack.c.b16 %v208, %v207
    %225 = vmatpush.bf16.msra.mxu0 %v216
    %226 = vmatpush.bf16.msra.mxu0 %v215
    %227 = vmatpush.bf16.msra.mxu0 %v214
    %228 = vmatpush.bf16.msra.mxu0 %v213
    %229 = vmatpush.bf16.msra.mxu0 %v212
    %230 = vmatpush.bf16.msra.mxu0 %v211
    %231 = vmatpush.bf16.msra.mxu0 %v210
    %232 = vmatpush.bf16.msra.mxu0 %v209
    %233 = vmatmul.bf16.gmra.mxu0 %v165
    %v234 = vpop.f32.mrf.mxu0
    %v235 = vadd.f32 %v139, %v234
    %v236 = vpop.f32.mrf.mxu0
    %v237 = vadd.f32 %v139, %v236
    %238 = vmatmul.bf16.gmra.mxu0 %v166
    %v239 = vpop.f32.mrf.mxu0
    %v240 = vadd.f32 %v139, %v239
    %v241 = vpop.f32.mrf.mxu0
    %v242 = vadd.f32 %v139, %v241
    %243 = vmatmul.bf16.gmra.mxu0 %v167
    %v244 = vpop.f32.mrf.mxu0
    %v245 = vadd.f32 %v139, %v244
    %v246 = vpop.f32.mrf.mxu0
    %v247 = vadd.f32 %v139, %v246
    %248 = vmatmul.bf16.gmra.mxu0 %v168
    %v249 = vpop.f32.mrf.mxu0
    %v250 = vadd.f32 %v139, %v249
    %v251 = vpop.f32.mrf.mxu0
    %v252 = vadd.f32 %v139, %v251
    %253 = vmatmul.bf16.gmra.mxu0 %v169
    %v254 = vpop.f32.mrf.mxu0
    %v255 = vadd.f32 %v139, %v254
    %v256 = vpop.f32.mrf.mxu0
    %v257 = vadd.f32 %v139, %v256
    %258 = vmatmul.bf16.gmra.mxu0 %v170
    %v259 = vpop.f32.mrf.mxu0
    %v260 = vadd.f32 %v139, %v259
    %v261 = vpop.f32.mrf.mxu0
    %v262 = vadd.f32 %v139, %v261
    %263 = vdwg.mxu0
    %v264 = vpack.c.bf16 %v235, %v235
    %v265 = vpack.c.bf16 %v237, %v237
    %v266 = vpack.c.bf16 %v240, %v240
    %v267 = vpack.c.bf16 %v242, %v242
    %v268 = vpack.c.bf16 %v245, %v245
    %v269 = vpack.c.bf16 %v247, %v247
    %v270 = vpack.c.bf16 %v250, %v250
    %v271 = vpack.c.bf16 %v252, %v252
    %v272 = vpack.c.bf16 %v255, %v255
    %v273 = vpack.c.bf16 %v257, %v257
    %v274 = vpack.c.bf16 %v260, %v260
    %v275 = vpack.c.bf16 %v262, %v262
    %276 = vst [vmem:[#allocation2] sm:$0xf] %v264
    %277 = vst [vmem:[#allocation2 + $0x4] sm:$0xf] %v265
    %278 = vst [vmem:[#allocation2 + $0x8] sm:$0xf] %v266
    %279 = vst [vmem:[#allocation2 + $0xc] sm:$0xf] %v267
    %280 = vst [vmem:[#allocation2 + $0x10] sm:$0xf] %v268
    %281 = vst [vmem:[#allocation2 + $0x14] sm:$0xf] %v269
    %282 = vst [vmem:[#allocation2 + $0x18] sm:$0xf] %v270
    %283 = vst [vmem:[#allocation2 + $0x1c] sm:$0xf] %v271
    %284 = vst [vmem:[#allocation2 + $0x20] sm:$0xf] %v272
    %285 = vst [vmem:[#allocation2 + $0x24] sm:$0xf] %v273
    %286 = vst [vmem:[#allocation2 + $0x28] sm:$0xf] %v274
    %287 = vst [vmem:[#allocation2 + $0x2c] sm:$0xf] %v275
    %v288 = vld [vmem:[#allocation9] sm:$0xf]
    %v289 = vld [vmem:[#allocation9 + $0x4] sm:$0xf]
    %v290 = vld [vmem:[#allocation9 + $0x8] sm:$0xf]
    %v291 = vld [vmem:[#allocation9 + $0xc] sm:$0xf]
    %v292 = vld [vmem:[#allocation9 + $0x10] sm:$0xf]
    %v293 = vld [vmem:[#allocation9 + $0x14] sm:$0xf]
    %v294 = vld [vmem:[#allocation9 + $0x18] sm:$0xf]
    %v295 = vld [vmem:[#allocation9 + $0x1c] sm:$0xf]
    %v296 = vld [vmem:[#allocation9 + $0x20] sm:$0xf]
    %v297 = vld [vmem:[#allocation9 + $0x24] sm:$0xf]
    %v298 = vld [vmem:[#allocation9 + $0x28] sm:$0xf]
    %v299 = vld [vmem:[#allocation9 + $0x2c] sm:$0xf]
    %v300 = vld [vmem:[#allocation9 + $0x30] sm:$0xf]
    %v301 = vld [vmem:[#allocation9 + $0x34] sm:$0xf]
    %v302 = vld [vmem:[#allocation9 + $0x38] sm:$0xf]
    %v303 = vld [vmem:[#allocation9 + $0x3c] sm:$0xf]
    %v304 = vld [vmem:[%s5] sm:$0x1]
    %v306 = vperm.slane %v304, 0
    %v324 = vunpack.c.l.b16 %v288
    %v325 = vunpack.c.l.b16 %v289
    %v326 = vunpack.c.l.b16 %v290
    %v327 = vunpack.c.l.b16 %v291
    %v328 = vunpack.c.l.b16 %v292
    %v329 = vunpack.c.l.b16 %v293
    %v330 = vunpack.c.l.b16 %v294
    %v331 = vunpack.c.l.b16 %v295
    %v332 = vunpack.c.l.b16 %v296
    %v333 = vunpack.c.l.b16 %v297
    %v334 = vunpack.c.l.b16 %v298
    %v335 = vunpack.c.l.b16 %v299
    %v336 = vunpack.c.l.b16 %v300
    %v337 = vunpack.c.l.b16 %v301
    %v338 = vunpack.c.l.b16 %v302
    %v339 = vunpack.c.l.b16 %v303
    %v340 = vpack.c.b16 %v325, %v324
    %v341 = vpack.c.b16 %v327, %v326
    %v342 = vpack.c.b16 %v329, %v328
    %v343 = vpack.c.b16 %v331, %v330
    %v344 = vpack.c.b16 %v333, %v332
    %v345 = vpack.c.b16 %v335, %v334
    %v346 = vpack.c.b16 %v337, %v336
    %v347 = vpack.c.b16 %v339, %v338
    %356 = vmatpush.bf16.msra.mxu0 %v347
    %357 = vmatpush.bf16.msra.mxu0 %v346
    %358 = vmatpush.bf16.msra.mxu0 %v345
    %359 = vmatpush.bf16.msra.mxu0 %v344
    %360 = vmatpush.bf16.msra.mxu0 %v343
    %361 = vmatpush.bf16.msra.mxu0 %v342
    %362 = vmatpush.bf16.msra.mxu0 %v341
    %363 = vmatpush.bf16.msra.mxu0 %v340
    %364 = vmatmul.bf16.gmra.mxu0 %v165
    %v365 = vpop.f32.mrf.mxu0
    %v366 = vadd.f32 %v306, %v365
    %v367 = vpop.f32.mrf.mxu0
    %v368 = vadd.f32 %v306, %v367
    %369 = vmatmul.bf16.gmra.mxu0 %v166
    %v370 = vpop.f32.mrf.mxu0
    %v371 = vadd.f32 %v306, %v370
    %v372 = vpop.f32.mrf.mxu0
    %v373 = vadd.f32 %v306, %v372
    %374 = vmatmul.bf16.gmra.mxu0 %v167
    %v375 = vpop.f32.mrf.mxu0
    %v376 = vadd.f32 %v306, %v375
    %v377 = vpop.f32.mrf.mxu0
    %v378 = vadd.f32 %v306, %v377
    %379 = vmatmul.bf16.gmra.mxu0 %v168
    %v380 = vpop.f32.mrf.mxu0
    %v381 = vadd.f32 %v306, %v380
    %v382 = vpop.f32.mrf.mxu0
    %v383 = vadd.f32 %v306, %v382
    %384 = vmatmul.bf16.gmra.mxu0 %v169
    %v385 = vpop.f32.mrf.mxu0
    %v386 = vadd.f32 %v306, %v385
    %v387 = vpop.f32.mrf.mxu0
    %v388 = vadd.f32 %v306, %v387
    %389 = vmatmul.bf16.gmra.mxu0 %v170
    %v390 = vpop.f32.mrf.mxu0
    %v391 = vadd.f32 %v306, %v390
    %v392 = vpop.f32.mrf.mxu0
    %v393 = vadd.f32 %v306, %v392
    %394 = vdwg.mxu0
    %v395 = vpack.c.bf16 %v366, %v366
    %v396 = vpack.c.bf16 %v368, %v368
    %v397 = vpack.c.bf16 %v371, %v371
    %v398 = vpack.c.bf16 %v373, %v373
    %v399 = vpack.c.bf16 %v376, %v376
    %v400 = vpack.c.bf16 %v378, %v378
    %v401 = vpack.c.bf16 %v381, %v381
    %v402 = vpack.c.bf16 %v383, %v383
    %v403 = vpack.c.bf16 %v386, %v386
    %v404 = vpack.c.bf16 %v388, %v388
    %v405 = vpack.c.bf16 %v391, %v391
    %v406 = vpack.c.bf16 %v393, %v393
    %407 = vst [vmem:[#allocation3] sm:$0xf] %v395
    %408 = vst [vmem:[#allocation3 + $0x4] sm:$0xf] %v396
    %409 = vst [vmem:[#allocation3 + $0x8] sm:$0xf] %v397
    %410 = vst [vmem:[#allocation3 + $0xc] sm:$0xf] %v398
    %411 = vst [vmem:[#allocation3 + $0x10] sm:$0xf] %v399
    %412 = vst [vmem:[#allocation3 + $0x14] sm:$0xf] %v400
    %413 = vst [vmem:[#allocation3 + $0x18] sm:$0xf] %v401
    %414 = vst [vmem:[#allocation3 + $0x1c] sm:$0xf] %v402
    %415 = vst [vmem:[#allocation3 + $0x20] sm:$0xf] %v403
    %416 = vst [vmem:[#allocation3 + $0x24] sm:$0xf] %v404
    %417 = vst [vmem:[#allocation3 + $0x28] sm:$0xf] %v405
    %418 = vst [vmem:[#allocation3 + $0x2c] sm:$0xf] %v406
    %v419 = vld [vmem:[%s1] sm:$0xff]
    %v420 = vld [vmem:[%s1 + $0x8] sm:$0xff]
    %421 = vset.pattern.permute.xlu0 0
    %422 = vperm.xlu0 %421, %v419
    %v423 = vpop.permute.xlu0 %422
    %424 = vset.pattern.permute.xlu0 0
    %425 = vperm.xlu0 %424, %v420
    %v426 = vpop.permute.xlu0 %425
    %v427 = vlaneseq
    %v428 = vand.u32 %v427, 127
    %vm429 = vcmp.ge.s32.totalorder %v428, 64
    %vm430 = vcmp.lt.s32.totalorder %v428, 96
    %vm431 = vmand %vm429, %vm430
    %v432 = vld [vmem:[#allocation2] sm:$0xf]
    %v433 = vld [vmem:[#allocation2 + $0x4] sm:$0xf]
    %v434 = vunpack.c.l.bf16 %v432
    %v435 = vunpack.c.l.bf16 %v433
    %v436 = vld [vmem:[#allocation10] sm:$0xf]
    %v437 = vld [vmem:[#allocation10 + $0x4] sm:$0xf]
    %v438 = vld [vmem:[#allocation10 + $0x8] sm:$0xf]
    %v439 = vld [vmem:[#allocation10 + $0xc] sm:$0xf]
    %v440 = vld [vmem:[#allocation10 + $0x10] sm:$0xf]
    %v441 = vld [vmem:[#allocation10 + $0x14] sm:$0xf]
    %v442 = vld [vmem:[#allocation10 + $0x18] sm:$0xf]
    %v443 = vld [vmem:[#allocation10 + $0x1c] sm:$0xf]
    %v444 = vld [vmem:[#allocation10 + $0x20] sm:$0xf]
    %v445 = vld [vmem:[#allocation10 + $0x24] sm:$0xf]
    %v446 = vld [vmem:[#allocation10 + $0x28] sm:$0xf]
    %v447 = vld [vmem:[#allocation10 + $0x2c] sm:$0xf]
    %v448 = vld [vmem:[#allocation10 + $0x30] sm:$0xf]
    %v449 = vld [vmem:[#allocation10 + $0x34] sm:$0xf]
    %v450 = vld [vmem:[#allocation10 + $0x38] sm:$0xf]
    %v451 = vld [vmem:[#allocation10 + $0x3c] sm:$0xf]
    %v468 = vunpack.c.l.b16 %v436
    %v469 = vunpack.c.l.b16 %v437
    %v470 = vunpack.c.l.b16 %v438
    %v471 = vunpack.c.l.b16 %v439
    %v472 = vunpack.c.l.b16 %v440
    %v473 = vunpack.c.l.b16 %v441
    %v474 = vunpack.c.l.b16 %v442
    %v475 = vunpack.c.l.b16 %v443
    %v476 = vunpack.c.l.b16 %v444
    %v477 = vunpack.c.l.b16 %v445
    %v478 = vunpack.c.l.b16 %v446
    %v479 = vunpack.c.l.b16 %v447
    %v480 = vunpack.c.l.b16 %v448
    %v481 = vunpack.c.l.b16 %v449
    %v482 = vunpack.c.l.b16 %v450
    %v483 = vunpack.c.l.b16 %v451
    %v484 = vpack.c.b16 %v469, %v468
    %v485 = vpack.c.b16 %v471, %v470
    %v486 = vpack.c.b16 %v473, %v472
    %v487 = vpack.c.b16 %v475, %v474
    %v488 = vpack.c.b16 %v477, %v476
    %v489 = vpack.c.b16 %v479, %v478
    %v490 = vpack.c.b16 %v481, %v480
    %v491 = vpack.c.b16 %v483, %v482
    %500 = vmatpush.bf16.msra.mxu0 %v491
    %501 = vmatpush.bf16.msra.mxu0 %v490
    %502 = vmatpush.bf16.msra.mxu0 %v489
    %503 = vmatpush.bf16.msra.mxu0 %v488
    %504 = vmatpush.bf16.msra.mxu0 %v487
    %505 = vmatpush.bf16.msra.mxu0 %v486
    %506 = vmatpush.bf16.msra.mxu0 %v485
    %507 = vmatpush.bf16.msra.mxu0 %v484
    %508 = vmatmul.bf16.gmra.mxu0 0
    %v509 = vpop.f32.mrf.mxu0
    %v510 = vadd.f32 0.0, %v509
    %v511 = vpop.f32.mrf.mxu0
    %v512 = vadd.f32 0.0, %v511
    %513 = vdwg.mxu0
    %v514 = vadd.f32 %v434, %v510
    %v515 = vadd.f32 %v435, %v512
    %v516 = vld [vmem:[#allocation3 + $0x28] sm:$0xf]
    %v517 = vld [vmem:[#allocation3 + $0x2c] sm:$0xf]
    %v518 = vunpack.c.l.bf16 %v516
    %v519 = vunpack.c.l.bf16 %v517
    %v520 = vld [vmem:[#allocation12] sm:$0xf]
    %v521 = vld [vmem:[#allocation12 + $0x4] sm:$0xf]
    %v522 = vld [vmem:[#allocation12 + $0x8] sm:$0xf]
    %v523 = vld [vmem:[#allocation12 + $0xc] sm:$0xf]
    %v524 = vld [vmem:[#allocation12 + $0x10] sm:$0xf]
    %v525 = vld [vmem:[#allocation12 + $0x14] sm:$0xf]
    %v526 = vld [vmem:[#allocation12 + $0x18] sm:$0xf]
    %v527 = vld [vmem:[#allocation12 + $0x1c] sm:$0xf]
    %v528 = vld [vmem:[#allocation12 + $0x20] sm:$0xf]
    %v529 = vld [vmem:[#allocation12 + $0x24] sm:$0xf]
    %v530 = vld [vmem:[#allocation12 + $0x28] sm:$0xf]
    %v531 = vld [vmem:[#allocation12 + $0x2c] sm:$0xf]
    %v532 = vld [vmem:[#allocation12 + $0x30] sm:$0xf]
    %v533 = vld [vmem:[#allocation12 + $0x34] sm:$0xf]
    %v534 = vld [vmem:[#allocation12 + $0x38] sm:$0xf]
    %v535 = vld [vmem:[#allocation12 + $0x3c] sm:$0xf]
    %v552 = vunpack.c.l.b16 %v520
    %v553 = vunpack.c.l.b16 %v521
    %v554 = vunpack.c.l.b16 %v522
    %v555 = vunpack.c.l.b16 %v523
    %v556 = vunpack.c.l.b16 %v524
    %v557 = vunpack.c.l.b16 %v525
    %v558 = vunpack.c.l.b16 %v526
    %v559 = vunpack.c.l.b16 %v527
    %v560 = vunpack.c.l.b16 %v528
    %v561 = vunpack.c.l.b16 %v529
    %v562 = vunpack.c.l.b16 %v530
    %v563 = vunpack.c.l.b16 %v531
    %v564 = vunpack.c.l.b16 %v532
    %v565 = vunpack.c.l.b16 %v533
    %v566 = vunpack.c.l.b16 %v534
    %v567 = vunpack.c.l.b16 %v535
    %v568 = vpack.c.b16 %v553, %v552
    %v569 = vpack.c.b16 %v555, %v554
    %v570 = vpack.c.b16 %v557, %v556
    %v571 = vpack.c.b16 %v559, %v558
    %v572 = vpack.c.b16 %v561, %v560
    %v573 = vpack.c.b16 %v563, %v562
    %v574 = vpack.c.b16 %v565, %v564
    %v575 = vpack.c.b16 %v567, %v566
    %584 = vmatpush.bf16.msra.mxu0 %v575
    %585 = vmatpush.bf16.msra.mxu0 %v574
    %586 = vmatpush.bf16.msra.mxu0 %v573
    %587 = vmatpush.bf16.msra.mxu0 %v572
    %588 = vmatpush.bf16.msra.mxu0 %v571
    %589 = vmatpush.bf16.msra.mxu0 %v570
    %590 = vmatpush.bf16.msra.mxu0 %v569
    %591 = vmatpush.bf16.msra.mxu0 %v568
    %592 = vmatmul.bf16.gmra.mxu0 0
    %v593 = vpop.f32.mrf.mxu0
    %v594 = vadd.f32 0.0, %v593
    %v595 = vpop.f32.mrf.mxu0
    %v596 = vadd.f32 0.0, %v595
    %597 = vdwg.mxu0
    %v598 = vadd.f32 %v518, %v594
    %v599 = vadd.f32 %v519, %v596
    %v600 = vmul.f32 %v514, 0.5
    %v601 = vmul.f32 %v515, 0.5
    %v602 = vtanh.pop %v600
    %v603 = vtanh.pop %v601
    %v604 = vadd.f32 %v602, 1.0
    %v605 = vadd.f32 %v603, 1.0
    %v606 = vmul.f32 %v604, 0.5
    %v607 = vmul.f32 %v605, 0.5
    %v608 = vtanh.pop %v514
    %v609 = vtanh.pop %v515
    %v610 = vsel %vm431, %v608, %v606
    %v611 = vsel %vm431, %v609, %v607
    %612 = vrot.lane.b32.xlu0 %v610, 96
    %v613 = vpop.permute.xlu0 %612
    %614 = vrot.lane.b32.xlu0 %v611, 96
    %v615 = vpop.permute.xlu0 %614
    %616 = vrot.lane.b32.xlu0 %v610, 64
    %v617 = vpop.permute.xlu0 %616
    %618 = vrot.lane.b32.xlu0 %v611, 64
    %v619 = vpop.permute.xlu0 %618
    %620 = vrot.lane.b32.xlu0 %v610, 32
    %v621 = vpop.permute.xlu0 %620
    %622 = vrot.lane.b32.xlu0 %v611, 32
    %v623 = vpop.permute.xlu0 %622
    %v624 = vmul.f32 %v613, 0.0
    %v625 = vmul.f32 %v615, 0.0
    %v626 = vmul.f32 %v610, %v617
    %v627 = vmul.f32 %v611, %v619
    %v628 = vadd.f32 %v624, %v626
    %v629 = vadd.f32 %v625, %v627
    %v630 = vtanh.pop %v628
    %v631 = vtanh.pop %v629
    %v632 = vmul.f32 %v621, %v630
    %v633 = vmul.f32 %v623, %v631
    %v634 = vmul.f32 %v598, 0.5
    %v635 = vmul.f32 %v599, 0.5
    %v636 = vtanh.pop %v634
    %v637 = vtanh.pop %v635
    %v638 = vadd.f32 %v636, 1.0
    %v639 = vadd.f32 %v637, 1.0
    %v640 = vmul.f32 %v638, 0.5
    %v641 = vmul.f32 %v639, 0.5
    %v642 = vtanh.pop %v598
    %v643 = vtanh.pop %v599
    %v644 = vsel %vm431, %v642, %v640
    %v645 = vsel %vm431, %v643, %v641
    %646 = vrot.lane.b32.xlu0 %v644, 96
    %v647 = vpop.permute.xlu0 %646
    %648 = vrot.lane.b32.xlu0 %v645, 96
    %v649 = vpop.permute.xlu0 %648
    %650 = vrot.lane.b32.xlu0 %v644, 64
    %v651 = vpop.permute.xlu0 %650
    %652 = vrot.lane.b32.xlu0 %v645, 64
    %v653 = vpop.permute.xlu0 %652
    %654 = vrot.lane.b32.xlu0 %v644, 32
    %v655 = vpop.permute.xlu0 %654
    %656 = vrot.lane.b32.xlu0 %v645, 32
    %v657 = vpop.permute.xlu0 %656
    %v658 = vmul.f32 %v647, 0.0
    %v659 = vmul.f32 %v649, 0.0
    %v660 = vmul.f32 %v644, %v651
    %v661 = vmul.f32 %v645, %v653
    %v662 = vadd.f32 %v658, %v660
    %v663 = vadd.f32 %v659, %v661
    %v664 = vtanh.pop %v662
    %v665 = vtanh.pop %v663
    %v666 = vmul.f32 %v655, %v664
    %v667 = vmul.f32 %v657, %v665
    %vm668 = vcmp.gt.s32.totalorder %v423, 0
    %vm669 = vcmp.gt.s32.totalorder %v426, 0
    %vm670 = vcmp.gt.s32.totalorder %v423, 5
    %vm671 = vcmp.gt.s32.totalorder %v426, 5
    %v672 = vsel %vm668, %v632, 0.0
    %v673 = vsel %vm669, %v633, 0.0
    %v674 = vsel %vm668, %v628, 0.0
    %v675 = vsel %vm669, %v629, 0.0
    %v676 = vsel %vm670, %v666, 0.0
    %v677 = vsel %vm671, %v667, 0.0
    %v678 = vsel %vm670, %v662, 0.0
    %v679 = vsel %vm671, %v663, 0.0
    %v680 = vld [vmem:[#allocation2 + $0x8] sm:$0xf]
    %v681 = vld [vmem:[#allocation2 + $0xc] sm:$0xf]
    %v682 = vunpack.c.l.bf16 %v680
    %v683 = vunpack.c.l.bf16 %v681
    %v684 = vpack.c.bf16 %v673, %v672
    %685 = vmatpush.bf16.msra.mxu0 %v491
    %686 = vmatpush.bf16.msra.mxu0 %v490
    %687 = vmatpush.bf16.msra.mxu0 %v489
    %688 = vmatpush.bf16.msra.mxu0 %v488
    %689 = vmatpush.bf16.msra.mxu0 %v487
    %690 = vmatpush.bf16.msra.mxu0 %v486
    %691 = vmatpush.bf16.msra.mxu0 %v485
    %692 = vmatpush.bf16.msra.mxu0 %v484
    %693 = vmatmul.bf16.gmra.mxu0 %v684
    %v694 = vpop.f32.mrf.mxu0
    %v695 = vadd.f32 0.0, %v694
    %v696 = vpop.f32.mrf.mxu0
    %v697 = vadd.f32 0.0, %v696
    %698 = vdwg.mxu0
    %v699 = vadd.f32 %v682, %v695
    %v700 = vadd.f32 %v683, %v697
    %v701 = vld [vmem:[#allocation3 + $0x20] sm:$0xf]
    %v702 = vld [vmem:[#allocation3 + $0x24] sm:$0xf]
    %v703 = vunpack.c.l.bf16 %v701
    %v704 = vunpack.c.l.bf16 %v702
    %v705 = vpack.c.bf16 %v677, %v676
    %706 = vmatpush.bf16.msra.mxu0 %v575
    %707 = vmatpush.bf16.msra.mxu0 %v574
    %708 = vmatpush.bf16.msra.mxu0 %v573
    %709 = vmatpush.bf16.msra.mxu0 %v572
    %710 = vmatpush.bf16.msra.mxu0 %v571
    %711 = vmatpush.bf16.msra.mxu0 %v570
    %712 = vmatpush.bf16.msra.mxu0 %v569
    %713 = vmatpush.bf16.msra.mxu0 %v568
    %714 = vmatmul.bf16.gmra.mxu0 %v705
    %v715 = vpop.f32.mrf.mxu0
    %v716 = vadd.f32 0.0, %v715
    %v717 = vpop.f32.mrf.mxu0
    %v718 = vadd.f32 0.0, %v717
    %719 = vdwg.mxu0
    %v720 = vadd.f32 %v703, %v716
    %v721 = vadd.f32 %v704, %v718
    %v722 = vmul.f32 %v699, 0.5
    %v723 = vmul.f32 %v700, 0.5
    %v724 = vtanh.pop %v722
    %v725 = vtanh.pop %v723
    %v726 = vadd.f32 %v724, 1.0
    %v727 = vadd.f32 %v725, 1.0
    %v728 = vmul.f32 %v726, 0.5
    %v729 = vmul.f32 %v727, 0.5
    %v730 = vtanh.pop %v699
    %v731 = vtanh.pop %v700
    %v732 = vsel %vm431, %v730, %v728
    %v733 = vsel %vm431, %v731, %v729
    %734 = vrot.lane.b32.xlu0 %v732, 96
    %v735 = vpop.permute.xlu0 %734
    %736 = vrot.lane.b32.xlu0 %v733, 96
    %v737 = vpop.permute.xlu0 %736
    %738 = vrot.lane.b32.xlu0 %v732, 64
    %v739 = vpop.permute.xlu0 %738
    %740 = vrot.lane.b32.xlu0 %v733, 64
    %v741 = vpop.permute.xlu0 %740
    %742 = vrot.lane.b32.xlu0 %v732, 32
    %v743 = vpop.permute.xlu0 %742
    %744 = vrot.lane.b32.xlu0 %v733, 32
    %v745 = vpop.permute.xlu0 %744
    %v746 = vmul.f32 %v735, %v674
    %v747 = vmul.f32 %v737, %v675
    %v748 = vmul.f32 %v732, %v739
    %v749 = vmul.f32 %v733, %v741
    %v750 = vadd.f32 %v746, %v748
    %v751 = vadd.f32 %v747, %v749
    %v752 = vtanh.pop %v750
    %v753 = vtanh.pop %v751
    %v754 = vmul.f32 %v743, %v752
    %v755 = vmul.f32 %v745, %v753
    %v756 = vmul.f32 %v720, 0.5
    %v757 = vmul.f32 %v721, 0.5
    %v758 = vtanh.pop %v756
    %v759 = vtanh.pop %v757
    %v760 = vadd.f32 %v758, 1.0
    %v761 = vadd.f32 %v759, 1.0
    %v762 = vmul.f32 %v760, 0.5
    %v763 = vmul.f32 %v761, 0.5
    %v764 = vtanh.pop %v720
    %v765 = vtanh.pop %v721
    %v766 = vsel %vm431, %v764, %v762
    %v767 = vsel %vm431, %v765, %v763
    %768 = vrot.lane.b32.xlu0 %v766, 96
    %v769 = vpop.permute.xlu0 %768
    %770 = vrot.lane.b32.xlu0 %v767, 96
    %v771 = vpop.permute.xlu0 %770
    %772 = vrot.lane.b32.xlu0 %v766, 64
    %v773 = vpop.permute.xlu0 %772
    %774 = vrot.lane.b32.xlu0 %v767, 64
    %v775 = vpop.permute.xlu0 %774
    %776 = vrot.lane.b32.xlu0 %v766, 32
    %v777 = vpop.permute.xlu0 %776
    %778 = vrot.lane.b32.xlu0 %v767, 32
    %v779 = vpop.permute.xlu0 %778
    %v780 = vmul.f32 %v769, %v678
    %v781 = vmul.f32 %v771, %v679
    %v782 = vmul.f32 %v766, %v773
    %v783 = vmul.f32 %v767, %v775
    %v784 = vadd.f32 %v780, %v782
    %v785 = vadd.f32 %v781, %v783
    %v786 = vtanh.pop %v784
    %v787 = vtanh.pop %v785
    %v788 = vmul.f32 %v777, %v786
    %v789 = vmul.f32 %v779, %v787
    %vm790 = vcmp.gt.s32.totalorder %v423, 1
    %vm791 = vcmp.gt.s32.totalorder %v426, 1
    %vm792 = vcmp.gt.s32.totalorder %v423, 4
    %vm793 = vcmp.gt.s32.totalorder %v426, 4
    %v794 = vsel %vm790, %v754, %v672
    %v795 = vsel %vm791, %v755, %v673
    %v796 = vsel %vm790, %v750, %v674
    %v797 = vsel %vm791, %v751, %v675
    %v798 = vsel %vm792, %v788, %v676
    %v799 = vsel %vm793, %v789, %v677
    %v800 = vsel %vm792, %v784, %v678
    %v801 = vsel %vm793, %v785, %v679
    %v802 = vld [vmem:[#allocation2 + $0x10] sm:$0xf]
    %v803 = vld [vmem:[#allocation2 + $0x14] sm:$0xf]
    %v804 = vunpack.c.l.bf16 %v802
    %v805 = vunpack.c.l.bf16 %v803
    %v806 = vpack.c.bf16 %v795, %v794
    %807 = vmatpush.bf16.msra.mxu0 %v491
    %808 = vmatpush.bf16.msra.mxu0 %v490
    %809 = vmatpush.bf16.msra.mxu0 %v489
    %810 = vmatpush.bf16.msra.mxu0 %v488
    %811 = vmatpush.bf16.msra.mxu0 %v487
    %812 = vmatpush.bf16.msra.mxu0 %v486
    %813 = vmatpush.bf16.msra.mxu0 %v485
    %814 = vmatpush.bf16.msra.mxu0 %v484
    %815 = vmatmul.bf16.gmra.mxu0 %v806
    %v816 = vpop.f32.mrf.mxu0
    %v817 = vadd.f32 0.0, %v816
    %v818 = vpop.f32.mrf.mxu0
    %v819 = vadd.f32 0.0, %v818
    %820 = vdwg.mxu0
    %v821 = vadd.f32 %v804, %v817
    %v822 = vadd.f32 %v805, %v819
    %v823 = vld [vmem:[#allocation3 + $0x18] sm:$0xf]
    %v824 = vld [vmem:[#allocation3 + $0x1c] sm:$0xf]
    %v825 = vunpack.c.l.bf16 %v823
    %v826 = vunpack.c.l.bf16 %v824
    %v827 = vpack.c.bf16 %v799, %v798
    %828 = vmatpush.bf16.msra.mxu0 %v575
    %829 = vmatpush.bf16.msra.mxu0 %v574
    %830 = vmatpush.bf16.msra.mxu0 %v573
    %831 = vmatpush.bf16.msra.mxu0 %v572
    %832 = vmatpush.bf16.msra.mxu0 %v571
    %833 = vmatpush.bf16.msra.mxu0 %v570
    %834 = vmatpush.bf16.msra.mxu0 %v569
    %835 = vmatpush.bf16.msra.mxu0 %v568
    %836 = vmatmul.bf16.gmra.mxu0 %v827
    %v837 = vpop.f32.mrf.mxu0
    %v838 = vadd.f32 0.0, %v837
    %v839 = vpop.f32.mrf.mxu0
    %v840 = vadd.f32 0.0, %v839
    %841 = vdwg.mxu0
    %v842 = vadd.f32 %v825, %v838
    %v843 = vadd.f32 %v826, %v840
    %v844 = vmul.f32 %v821, 0.5
    %v845 = vmul.f32 %v822, 0.5
    %v846 = vtanh.pop %v844
    %v847 = vtanh.pop %v845
    %v848 = vadd.f32 %v846, 1.0
    %v849 = vadd.f32 %v847, 1.0
    %v850 = vmul.f32 %v848, 0.5
    %v851 = vmul.f32 %v849, 0.5
    %v852 = vtanh.pop %v821
    %v853 = vtanh.pop %v822
    %v854 = vsel %vm431, %v852, %v850
    %v855 = vsel %vm431, %v853, %v851
    %856 = vrot.lane.b32.xlu0 %v854, 96
    %v857 = vpop.permute.xlu0 %856
    %858 = vrot.lane.b32.xlu0 %v855, 96
    %v859 = vpop.permute.xlu0 %858
    %860 = vrot.lane.b32.xlu0 %v854, 64
    %v861 = vpop.permute.xlu0 %860
    %862 = vrot.lane.b32.xlu0 %v855, 64
    %v863 = vpop.permute.xlu0 %862
    %864 = vrot.lane.b32.xlu0 %v854, 32
    %v865 = vpop.permute.xlu0 %864
    %866 = vrot.lane.b32.xlu0 %v855, 32
    %v867 = vpop.permute.xlu0 %866
    %v868 = vmul.f32 %v857, %v796
    %v869 = vmul.f32 %v859, %v797
    %v870 = vmul.f32 %v854, %v861
    %v871 = vmul.f32 %v855, %v863
    %v872 = vadd.f32 %v868, %v870
    %v873 = vadd.f32 %v869, %v871
    %v874 = vtanh.pop %v872
    %v875 = vtanh.pop %v873
    %v876 = vmul.f32 %v865, %v874
    %v877 = vmul.f32 %v867, %v875
    %v878 = vmul.f32 %v842, 0.5
    %v879 = vmul.f32 %v843, 0.5
    %v880 = vtanh.pop %v878
    %v881 = vtanh.pop %v879
    %v882 = vadd.f32 %v880, 1.0
    %v883 = vadd.f32 %v881, 1.0
    %v884 = vmul.f32 %v882, 0.5
    %v885 = vmul.f32 %v883, 0.5
    %v886 = vtanh.pop %v842
    %v887 = vtanh.pop %v843
    %v888 = vsel %vm431, %v886, %v884
    %v889 = vsel %vm431, %v887, %v885
    %890 = vrot.lane.b32.xlu0 %v888, 96
    %v891 = vpop.permute.xlu0 %890
    %892 = vrot.lane.b32.xlu0 %v889, 96
    %v893 = vpop.permute.xlu0 %892
    %894 = vrot.lane.b32.xlu0 %v888, 64
    %v895 = vpop.permute.xlu0 %894
    %896 = vrot.lane.b32.xlu0 %v889, 64
    %v897 = vpop.permute.xlu0 %896
    %898 = vrot.lane.b32.xlu0 %v888, 32
    %v899 = vpop.permute.xlu0 %898
    %900 = vrot.lane.b32.xlu0 %v889, 32
    %v901 = vpop.permute.xlu0 %900
    %v902 = vmul.f32 %v891, %v800
    %v903 = vmul.f32 %v893, %v801
    %v904 = vmul.f32 %v888, %v895
    %v905 = vmul.f32 %v889, %v897
    %v906 = vadd.f32 %v902, %v904
    %v907 = vadd.f32 %v903, %v905
    %v908 = vtanh.pop %v906
    %v909 = vtanh.pop %v907
    %v910 = vmul.f32 %v899, %v908
    %v911 = vmul.f32 %v901, %v909
    %vm912 = vcmp.gt.s32.totalorder %v423, 2
    %vm913 = vcmp.gt.s32.totalorder %v426, 2
    %vm914 = vcmp.gt.s32.totalorder %v423, 3
    %vm915 = vcmp.gt.s32.totalorder %v426, 3
    %v916 = vsel %vm912, %v876, %v794
    %v917 = vsel %vm913, %v877, %v795
    %v918 = vsel %vm912, %v872, %v796
    %v919 = vsel %vm913, %v873, %v797
    %v920 = vsel %vm914, %v910, %v798
    %v921 = vsel %vm915, %v911, %v799
    %v922 = vsel %vm914, %v906, %v800
    %v923 = vsel %vm915, %v907, %v801
    %v924 = vld [vmem:[#allocation2 + $0x18] sm:$0xf]
    %v925 = vld [vmem:[#allocation2 + $0x1c] sm:$0xf]
    %v926 = vunpack.c.l.bf16 %v924
    %v927 = vunpack.c.l.bf16 %v925
    %v928 = vpack.c.bf16 %v917, %v916
    %929 = vmatpush.bf16.msra.mxu0 %v491
    %930 = vmatpush.bf16.msra.mxu0 %v490
    %931 = vmatpush.bf16.msra.mxu0 %v489
    %932 = vmatpush.bf16.msra.mxu0 %v488
    %933 = vmatpush.bf16.msra.mxu0 %v487
    %934 = vmatpush.bf16.msra.mxu0 %v486
    %935 = vmatpush.bf16.msra.mxu0 %v485
    %936 = vmatpush.bf16.msra.mxu0 %v484
    %937 = vmatmul.bf16.gmra.mxu0 %v928
    %v938 = vpop.f32.mrf.mxu0
    %v939 = vadd.f32 0.0, %v938
    %v940 = vpop.f32.mrf.mxu0
    %v941 = vadd.f32 0.0, %v940
    %942 = vdwg.mxu0
    %v943 = vadd.f32 %v926, %v939
    %v944 = vadd.f32 %v927, %v941
    %v945 = vld [vmem:[#allocation3 + $0x10] sm:$0xf]
    %v946 = vld [vmem:[#allocation3 + $0x14] sm:$0xf]
    %v947 = vunpack.c.l.bf16 %v945
    %v948 = vunpack.c.l.bf16 %v946
    %v949 = vpack.c.bf16 %v921, %v920
    %950 = vmatpush.bf16.msra.mxu0 %v575
    %951 = vmatpush.bf16.msra.mxu0 %v574
    %952 = vmatpush.bf16.msra.mxu0 %v573
    %953 = vmatpush.bf16.msra.mxu0 %v572
    %954 = vmatpush.bf16.msra.mxu0 %v571
    %955 = vmatpush.bf16.msra.mxu0 %v570
    %956 = vmatpush.bf16.msra.mxu0 %v569
    %957 = vmatpush.bf16.msra.mxu0 %v568
    %958 = vmatmul.bf16.gmra.mxu0 %v949
    %v959 = vpop.f32.mrf.mxu0
    %v960 = vadd.f32 0.0, %v959
    %v961 = vpop.f32.mrf.mxu0
    %v962 = vadd.f32 0.0, %v961
    %963 = vdwg.mxu0
    %v964 = vadd.f32 %v947, %v960
    %v965 = vadd.f32 %v948, %v962
    %v966 = vmul.f32 %v943, 0.5
    %v967 = vmul.f32 %v944, 0.5
    %v968 = vtanh.pop %v966
    %v969 = vtanh.pop %v967
    %v970 = vadd.f32 %v968, 1.0
    %v971 = vadd.f32 %v969, 1.0
    %v972 = vmul.f32 %v970, 0.5
    %v973 = vmul.f32 %v971, 0.5
    %v974 = vtanh.pop %v943
    %v975 = vtanh.pop %v944
    %v976 = vsel %vm431, %v974, %v972
    %v977 = vsel %vm431, %v975, %v973
    %978 = vrot.lane.b32.xlu0 %v976, 96
    %v979 = vpop.permute.xlu0 %978
    %980 = vrot.lane.b32.xlu0 %v977, 96
    %v981 = vpop.permute.xlu0 %980
    %982 = vrot.lane.b32.xlu0 %v976, 64
    %v983 = vpop.permute.xlu0 %982
    %984 = vrot.lane.b32.xlu0 %v977, 64
    %v985 = vpop.permute.xlu0 %984
    %986 = vrot.lane.b32.xlu0 %v976, 32
    %v987 = vpop.permute.xlu0 %986
    %988 = vrot.lane.b32.xlu0 %v977, 32
    %v989 = vpop.permute.xlu0 %988
    %v990 = vmul.f32 %v979, %v918
    %v991 = vmul.f32 %v981, %v919
    %v992 = vmul.f32 %v976, %v983
    %v993 = vmul.f32 %v977, %v985
    %v994 = vadd.f32 %v990, %v992
    %v995 = vadd.f32 %v991, %v993
    %v996 = vtanh.pop %v994
    %v997 = vtanh.pop %v995
    %v998 = vmul.f32 %v987, %v996
    %v999 = vmul.f32 %v989, %v997
    %v1000 = vmul.f32 %v964, 0.5
    %v1001 = vmul.f32 %v965, 0.5
    %v1002 = vtanh.pop %v1000
    %v1003 = vtanh.pop %v1001
    %v1004 = vadd.f32 %v1002, 1.0
    %v1005 = vadd.f32 %v1003, 1.0
    %v1006 = vmul.f32 %v1004, 0.5
    %v1007 = vmul.f32 %v1005, 0.5
    %v1008 = vtanh.pop %v964
    %v1009 = vtanh.pop %v965
    %v1010 = vsel %vm431, %v1008, %v1006
    %v1011 = vsel %vm431, %v1009, %v1007
    %1012 = vrot.lane.b32.xlu0 %v1010, 96
    %v1013 = vpop.permute.xlu0 %1012
    %1014 = vrot.lane.b32.xlu0 %v1011, 96
    %v1015 = vpop.permute.xlu0 %1014
    %1016 = vrot.lane.b32.xlu0 %v1010, 64
    %v1017 = vpop.permute.xlu0 %1016
    %1018 = vrot.lane.b32.xlu0 %v1011, 64
    %v1019 = vpop.permute.xlu0 %1018
    %1020 = vrot.lane.b32.xlu0 %v1010, 32
    %v1021 = vpop.permute.xlu0 %1020
    %1022 = vrot.lane.b32.xlu0 %v1011, 32
    %v1023 = vpop.permute.xlu0 %1022
    %v1024 = vmul.f32 %v1013, %v922
    %v1025 = vmul.f32 %v1015, %v923
    %v1026 = vmul.f32 %v1010, %v1017
    %v1027 = vmul.f32 %v1011, %v1019
    %v1028 = vadd.f32 %v1024, %v1026
    %v1029 = vadd.f32 %v1025, %v1027
    %v1030 = vtanh.pop %v1028
    %v1031 = vtanh.pop %v1029
    %v1032 = vmul.f32 %v1021, %v1030
    %v1033 = vmul.f32 %v1023, %v1031
    %v1034 = vsel %vm914, %v998, %v916
    %v1035 = vsel %vm915, %v999, %v917
    %v1036 = vsel %vm914, %v994, %v918
    %v1037 = vsel %vm915, %v995, %v919
    %v1038 = vsel %vm912, %v1032, %v920
    %v1039 = vsel %vm913, %v1033, %v921
    %v1040 = vsel %vm912, %v1028, %v922
    %v1041 = vsel %vm913, %v1029, %v923
    %v1042 = vld [vmem:[#allocation2 + $0x20] sm:$0xf]
    %v1043 = vld [vmem:[#allocation2 + $0x24] sm:$0xf]
    %v1044 = vunpack.c.l.bf16 %v1042
    %v1045 = vunpack.c.l.bf16 %v1043
    %v1046 = vpack.c.bf16 %v1035, %v1034
    %1047 = vmatpush.bf16.msra.mxu0 %v491
    %1048 = vmatpush.bf16.msra.mxu0 %v490
    %1049 = vmatpush.bf16.msra.mxu0 %v489
    %1050 = vmatpush.bf16.msra.mxu0 %v488
    %1051 = vmatpush.bf16.msra.mxu0 %v487
    %1052 = vmatpush.bf16.msra.mxu0 %v486
    %1053 = vmatpush.bf16.msra.mxu0 %v485
    %1054 = vmatpush.bf16.msra.mxu0 %v484
    %1055 = vmatmul.bf16.gmra.mxu0 %v1046
    %v1056 = vpop.f32.mrf.mxu0
    %v1057 = vadd.f32 0.0, %v1056
    %v1058 = vpop.f32.mrf.mxu0
    %v1059 = vadd.f32 0.0, %v1058
    %1060 = vdwg.mxu0
    %v1061 = vadd.f32 %v1044, %v1057
    %v1062 = vadd.f32 %v1045, %v1059
    %v1063 = vld [vmem:[#allocation3 + $0x8] sm:$0xf]
    %v1064 = vld [vmem:[#allocation3 + $0xc] sm:$0xf]
    %v1065 = vunpack.c.l.bf16 %v1063
    %v1066 = vunpack.c.l.bf16 %v1064
    %v1067 = vpack.c.bf16 %v1039, %v1038
    %1068 = vmatpush.bf16.msra.mxu0 %v575
    %1069 = vmatpush.bf16.msra.mxu0 %v574
    %1070 = vmatpush.bf16.msra.mxu0 %v573
    %1071 = vmatpush.bf16.msra.mxu0 %v572
    %1072 = vmatpush.bf16.msra.mxu0 %v571
    %1073 = vmatpush.bf16.msra.mxu0 %v570
    %1074 = vmatpush.bf16.msra.mxu0 %v569
    %1075 = vmatpush.bf16.msra.mxu0 %v568
    %1076 = vmatmul.bf16.gmra.mxu0 %v1067
    %v1077 = vpop.f32.mrf.mxu0
    %v1078 = vadd.f32 0.0, %v1077
    %v1079 = vpop.f32.mrf.mxu0
    %v1080 = vadd.f32 0.0, %v1079
    %1081 = vdwg.mxu0
    %v1082 = vadd.f32 %v1065, %v1078
    %v1083 = vadd.f32 %v1066, %v1080
    %v1084 = vmul.f32 %v1061, 0.5
    %v1085 = vmul.f32 %v1062, 0.5
    %v1086 = vtanh.pop %v1084
    %v1087 = vtanh.pop %v1085
    %v1088 = vadd.f32 %v1086, 1.0
    %v1089 = vadd.f32 %v1087, 1.0
    %v1090 = vmul.f32 %v1088, 0.5
    %v1091 = vmul.f32 %v1089, 0.5
    %v1092 = vtanh.pop %v1061
    %v1093 = vtanh.pop %v1062
    %v1094 = vsel %vm431, %v1092, %v1090
    %v1095 = vsel %vm431, %v1093, %v1091
    %1096 = vrot.lane.b32.xlu0 %v1094, 96
    %v1097 = vpop.permute.xlu0 %1096
    %1098 = vrot.lane.b32.xlu0 %v1095, 96
    %v1099 = vpop.permute.xlu0 %1098
    %1100 = vrot.lane.b32.xlu0 %v1094, 64
    %v1101 = vpop.permute.xlu0 %1100
    %1102 = vrot.lane.b32.xlu0 %v1095, 64
    %v1103 = vpop.permute.xlu0 %1102
    %1104 = vrot.lane.b32.xlu0 %v1094, 32
    %v1105 = vpop.permute.xlu0 %1104
    %1106 = vrot.lane.b32.xlu0 %v1095, 32
    %v1107 = vpop.permute.xlu0 %1106
    %v1108 = vmul.f32 %v1097, %v1036
    %v1109 = vmul.f32 %v1099, %v1037
    %v1110 = vmul.f32 %v1094, %v1101
    %v1111 = vmul.f32 %v1095, %v1103
    %v1112 = vadd.f32 %v1108, %v1110
    %v1113 = vadd.f32 %v1109, %v1111
    %v1114 = vtanh.pop %v1112
    %v1115 = vtanh.pop %v1113
    %v1116 = vmul.f32 %v1105, %v1114
    %v1117 = vmul.f32 %v1107, %v1115
    %v1118 = vmul.f32 %v1082, 0.5
    %v1119 = vmul.f32 %v1083, 0.5
    %v1120 = vtanh.pop %v1118
    %v1121 = vtanh.pop %v1119
    %v1122 = vadd.f32 %v1120, 1.0
    %v1123 = vadd.f32 %v1121, 1.0
    %v1124 = vmul.f32 %v1122, 0.5
    %v1125 = vmul.f32 %v1123, 0.5
    %v1126 = vtanh.pop %v1082
    %v1127 = vtanh.pop %v1083
    %v1128 = vsel %vm431, %v1126, %v1124
    %v1129 = vsel %vm431, %v1127, %v1125
    %1130 = vrot.lane.b32.xlu0 %v1128, 96
    %v1131 = vpop.permute.xlu0 %1130
    %1132 = vrot.lane.b32.xlu0 %v1129, 96
    %v1133 = vpop.permute.xlu0 %1132
    %1134 = vrot.lane.b32.xlu0 %v1128, 64
    %v1135 = vpop.permute.xlu0 %1134
    %1136 = vrot.lane.b32.xlu0 %v1129, 64
    %v1137 = vpop.permute.xlu0 %1136
    %1138 = vrot.lane.b32.xlu0 %v1128, 32
    %v1139 = vpop.permute.xlu0 %1138
    %1140 = vrot.lane.b32.xlu0 %v1129, 32
    %v1141 = vpop.permute.xlu0 %1140
    %v1142 = vmul.f32 %v1131, %v1040
    %v1143 = vmul.f32 %v1133, %v1041
    %v1144 = vmul.f32 %v1128, %v1135
    %v1145 = vmul.f32 %v1129, %v1137
    %v1146 = vadd.f32 %v1142, %v1144
    %v1147 = vadd.f32 %v1143, %v1145
    %v1148 = vtanh.pop %v1146
    %v1149 = vtanh.pop %v1147
    %v1150 = vmul.f32 %v1139, %v1148
    %v1151 = vmul.f32 %v1141, %v1149
    %v1152 = vsel %vm792, %v1116, %v1034
    %v1153 = vsel %vm793, %v1117, %v1035
    %v1154 = vsel %vm792, %v1112, %v1036
    %v1155 = vsel %vm793, %v1113, %v1037
    %v1156 = vsel %vm790, %v1150, %v1038
    %v1157 = vsel %vm791, %v1151, %v1039
    %v1158 = vsel %vm790, %v1146, %v1040
    %v1159 = vsel %vm791, %v1147, %v1041
    %v1160 = vld [vmem:[#allocation2 + $0x28] sm:$0xf]
    %v1161 = vld [vmem:[#allocation2 + $0x2c] sm:$0xf]
    %v1162 = vunpack.c.l.bf16 %v1160
    %v1163 = vunpack.c.l.bf16 %v1161
    %v1164 = vpack.c.bf16 %v1153, %v1152
    %1165 = vmatpush.bf16.msra.mxu0 %v491
    %1166 = vmatpush.bf16.msra.mxu0 %v490
    %1167 = vmatpush.bf16.msra.mxu0 %v489
    %1168 = vmatpush.bf16.msra.mxu0 %v488
    %1169 = vmatpush.bf16.msra.mxu0 %v487
    %1170 = vmatpush.bf16.msra.mxu0 %v486
    %1171 = vmatpush.bf16.msra.mxu0 %v485
    %1172 = vmatpush.bf16.msra.mxu0 %v484
    %1173 = vmatmul.bf16.gmra.mxu0 %v1164
    %v1174 = vpop.f32.mrf.mxu0
    %v1175 = vadd.f32 0.0, %v1174
    %v1176 = vpop.f32.mrf.mxu0
    %v1177 = vadd.f32 0.0, %v1176
    %1178 = vdwg.mxu0
    %v1179 = vadd.f32 %v1162, %v1175
    %v1180 = vadd.f32 %v1163, %v1177
    %v1181 = vld [vmem:[#allocation3] sm:$0xf]
    %v1182 = vld [vmem:[#allocation3 + $0x4] sm:$0xf]
    %v1183 = vunpack.c.l.bf16 %v1181
    %v1184 = vunpack.c.l.bf16 %v1182
    %v1185 = vpack.c.bf16 %v1157, %v1156
    %1186 = vmatpush.bf16.msra.mxu0 %v575
    %1187 = vmatpush.bf16.msra.mxu0 %v574
    %1188 = vmatpush.bf16.msra.mxu0 %v573
    %1189 = vmatpush.bf16.msra.mxu0 %v572
    %1190 = vmatpush.bf16.msra.mxu0 %v571
    %1191 = vmatpush.bf16.msra.mxu0 %v570
    %1192 = vmatpush.bf16.msra.mxu0 %v569
    %1193 = vmatpush.bf16.msra.mxu0 %v568
    %1194 = vmatmul.bf16.gmra.mxu0 %v1185
    %v1195 = vpop.f32.mrf.mxu0
    %v1196 = vadd.f32 0.0, %v1195
    %v1197 = vpop.f32.mrf.mxu0
    %v1198 = vadd.f32 0.0, %v1197
    %1199 = vdwg.mxu0
    %v1200 = vadd.f32 %v1183, %v1196
    %v1201 = vadd.f32 %v1184, %v1198
    %v1202 = vmul.f32 %v1179, 0.5
    %v1203 = vmul.f32 %v1180, 0.5
    %v1204 = vtanh.pop %v1202
    %v1205 = vtanh.pop %v1203
    %v1206 = vadd.f32 %v1204, 1.0
    %v1207 = vadd.f32 %v1205, 1.0
    %v1208 = vmul.f32 %v1206, 0.5
    %v1209 = vmul.f32 %v1207, 0.5
    %v1210 = vtanh.pop %v1179
    %v1211 = vtanh.pop %v1180
    %v1212 = vsel %vm431, %v1210, %v1208
    %v1213 = vsel %vm431, %v1211, %v1209
    %1214 = vrot.lane.b32.xlu0 %v1212, 96
    %v1215 = vpop.permute.xlu0 %1214
    %1216 = vrot.lane.b32.xlu0 %v1213, 96
    %v1217 = vpop.permute.xlu0 %1216
    %1218 = vrot.lane.b32.xlu0 %v1212, 64
    %v1219 = vpop.permute.xlu0 %1218
    %1220 = vrot.lane.b32.xlu0 %v1213, 64
    %v1221 = vpop.permute.xlu0 %1220
    %1222 = vrot.lane.b32.xlu0 %v1212, 32
    %v1223 = vpop.permute.xlu0 %1222
    %1224 = vrot.lane.b32.xlu0 %v1213, 32
    %v1225 = vpop.permute.xlu0 %1224
    %v1226 = vmul.f32 %v1215, %v1154
    %v1227 = vmul.f32 %v1217, %v1155
    %v1228 = vmul.f32 %v1212, %v1219
    %v1229 = vmul.f32 %v1213, %v1221
    %v1230 = vadd.f32 %v1226, %v1228
    %v1231 = vadd.f32 %v1227, %v1229
    %v1232 = vtanh.pop %v1230
    %v1233 = vtanh.pop %v1231
    %v1234 = vmul.f32 %v1223, %v1232
    %v1235 = vmul.f32 %v1225, %v1233
    %v1236 = vmul.f32 %v1200, 0.5
    %v1237 = vmul.f32 %v1201, 0.5
    %v1238 = vtanh.pop %v1236
    %v1239 = vtanh.pop %v1237
    %v1240 = vadd.f32 %v1238, 1.0
    %v1241 = vadd.f32 %v1239, 1.0
    %v1242 = vmul.f32 %v1240, 0.5
    %v1243 = vmul.f32 %v1241, 0.5
    %v1244 = vtanh.pop %v1200
    %v1245 = vtanh.pop %v1201
    %v1246 = vsel %vm431, %v1244, %v1242
    %v1247 = vsel %vm431, %v1245, %v1243
    %1248 = vrot.lane.b32.xlu0 %v1246, 96
    %v1249 = vpop.permute.xlu0 %1248
    %1250 = vrot.lane.b32.xlu0 %v1247, 96
    %v1251 = vpop.permute.xlu0 %1250
    %1252 = vrot.lane.b32.xlu0 %v1246, 64
    %v1253 = vpop.permute.xlu0 %1252
    %1254 = vrot.lane.b32.xlu0 %v1247, 64
    %v1255 = vpop.permute.xlu0 %1254
    %1256 = vrot.lane.b32.xlu0 %v1246, 32
    %v1257 = vpop.permute.xlu0 %1256
    %1258 = vrot.lane.b32.xlu0 %v1247, 32
    %v1259 = vpop.permute.xlu0 %1258
    %v1260 = vmul.f32 %v1249, %v1158
    %v1261 = vmul.f32 %v1251, %v1159
    %v1262 = vmul.f32 %v1246, %v1253
    %v1263 = vmul.f32 %v1247, %v1255
    %v1264 = vadd.f32 %v1260, %v1262
    %v1265 = vadd.f32 %v1261, %v1263
    %v1266 = vtanh.pop %v1264
    %v1267 = vtanh.pop %v1265
    %v1268 = vmul.f32 %v1257, %v1266
    %v1269 = vmul.f32 %v1259, %v1267
    %v1270 = vsel %vm670, %v1234, %v1152
    %v1271 = vsel %vm671, %v1235, %v1153
    %v1272 = vsel %vm668, %v1268, %v1156
    %v1273 = vsel %vm669, %v1269, %v1157
    %v1274 = vadd.f32 %v1270, %v1272
    %v1275 = vadd.f32 %v1271, %v1273
    %v1276 = vmul.f32 %v1274, 0.5
    %v1277 = vmul.f32 %v1275, 0.5
    %1278 = vst [vmem:[#allocation13] sm:$0xff] %v1276
    %1279 = vst [vmem:[#allocation13 + $0x8] sm:$0xff] %v1277
    // Predicated region
    $region54: #{tpu_custom_call.1} parent=1 // pred_check
      _
    $region55: #{tpu_custom_call.1} parent=1 // pred_check_branch
      %1281 = sbr.rel (0) target = $region57
    $region56: #{tpu_custom_call.1} parent=1 // pred_region
      %1283 = vsyncadd [#allocation6], 0
      %s1284 = sshll.u32 [#allocation13], 4
      %s1285 = int_to_ptr.vmem [resolvable:$true] %s1284
      %s1286 = sshll.u32 %s8, 4
      %s1287 = int_to_ptr.hbm [resolvable:$true] %s1286
      %1292 = dma.vmem_to_hbm [thread:$0]  %s1285, 256, %s1287, [#allocation6], 128, 128, 8
    $region57: #{tpu_custom_call.1} parent=1 // pred_fallthru
      _
    // Predicated region
    $region58: #{tpu_custom_call.1} parent=1 // pred_check
      _
    $region59: #{tpu_custom_call.1} parent=1 // pred_check_branch
      %1294 = sbr.rel (0) target = $region61
    $region60: #{tpu_custom_call.1} parent=1 // pred_region
      %1296 = dma.done [#allocation6], 256
    $region61: #{tpu_custom_call.1} parent=1 // pred_fallthru
      _
    %1297 = vsyncpa [#allocation5], 1
    %1298 = vsyncpa [#allocation8], 1
    %1299 = vsyncpa [#allocation11], 1
    %1300 = vsyncpa [#allocation6], 1

</llo_original>
